<compile_context>
chip_gen: v7x
topology: tpu7x:2x2x1
jax: 0.10.0
libtpu: 0.0.40
codegen_flags: <defaults>
</compile_context>

<pallas_src>
import math
import functools

import jax
import jax.numpy as jnp
from jax.experimental import pallas as pl
from jax.experimental.pallas import tpu as pltpu


def _seq_attention_kernel(q_ref, pe_ref, *refs, hidden_size, attn_span, nkb):
    # q_ref: (1, TM, H)  pe_ref: (H, L)
    # refs : nkb key blocks (1, TM, H), nkb value blocks (1, TM, H), out (1, TM, H)
    k_refs = refs[:nkb]
    v_refs = refs[nkb:2 * nkb]
    o_ref = refs[2 * nkb]

    L = attn_span
    scale = 1.0 / math.sqrt(hidden_size)

    # Fold the 1/sqrt(H) scaling into Q once (native dtype -> feeds both MXU
    # matmuls); avoids scaling the full (TM, KW) score matrix later.
    q = q_ref[0] * scale                 # (TM, H), native dtype
    pe = pe_ref[...]                     # (H, L),  native dtype

    # Context scores over the local window, one MXU matmul per key sub-block.
    s = jnp.concatenate(
        [jax.lax.dot_general(q, kr[0], (((1,), (1,)), ((), ())),
                             preferred_element_type=jnp.float32)
         for kr in k_refs],
        axis=1)                                               # (TM, KW) f32
    TM, KW = s.shape

    # Positional scores P[m, j] = q[m] . pe[:, j].
    p = jnp.dot(q, pe, preferred_element_type=jnp.float32)    # (TM, L) f32

    rows = jax.lax.broadcasted_iota(jnp.int32, (TM, KW), 0)
    cols = jax.lax.broadcasted_iota(jnp.int32, (TM, KW), 1)
    off = cols - rows                        # window offset j = c - m
    band = (off >= 0) & (off < L)            # support of _skew/_unskew

    # Skew P onto the window grid: pos_full[m, m + j] = P[m, j].
    if KW % 128 == 0 and TM % 8 == 0:
        # Single strided XLU rotation: row m rotated right by m positions.
        p_full = jnp.concatenate(
            [p, jnp.zeros((TM, KW - L), jnp.float32)], axis=1)
        pos_full = pltpu.roll(p_full, shift=0, axis=1, stride=1, stride_axis=0)
    else:
        # Fallback only for tiny / lane-misaligned spans (compile-time unroll).
        pos_full = jnp.zeros((TM, KW), jnp.float32)
        for j in range(L):
            pos_full = pos_full + jnp.where(off == j, p[:, j:j + 1], 0.0)

    logits = jnp.where(band, s + pos_full, -jnp.inf)

    # Banded softmax == softmax(_unskew(S) + P, -1); expanded form == _skew(.,0)
    m_max = jnp.max(logits, axis=-1, keepdims=True)
    e = jnp.where(band, jnp.exp(logits - m_max), 0.0)
    denom = jnp.sum(e, axis=-1, keepdims=True)
    probs = (e * pl.reciprocal(denom, approx=True)).astype(v_refs[0].dtype)

    # TODO(synk): nn.Dropout is treated as inference-mode identity (no RNG).

    # out = _skew(softmax, 0) @ V, accumulated per value sub-block (MXU).
    tm_k = KW // nkb
    out = None
    for n, vr in enumerate(v_refs):
        part = jnp.dot(probs[:, n * tm_k:(n + 1) * tm_k], vr[0],
                       preferred_element_type=jnp.float32)
        out = part if out is None else out + part
    o_ref[0] = out.astype(o_ref.dtype)


def _choose_block_q(M):
    for t in (128, 256, 64, 32, 16, 8):
        if M % t == 0:
            return t
    return M


def seq_attention(query, key, value, pos_encoding, *, hidden_size, attn_span,
                  dropout=0.0, block_q=None):
    """Pallas forward of SeqAttention (dropout is identity / eval mode)."""
    del dropout
    B, M, H = query.shape
    L = attn_span
    assert key.shape == (B, M + L, H)
    assert value.shape == (B, M + L, H)
    assert pos_encoding.shape == (H, L)

    TM = block_q if block_q is not None else _choose_block_q(M)
    assert M % TM == 0
    n_q = M // TM
    nkb = 1 + (-(-L // TM))                 # key sub-blocks per query tile
    kl_pad = (n_q - 1 + nkb) * TM           # padded key/value length
    pad = kl_pad - (M + L)
    if pad > 0:                             # pad so every window is in-bounds
        key = jnp.pad(key, ((0, 0), (0, pad), (0, 0)))
        value = jnp.pad(value, ((0, 0), (0, pad), (0, 0)))

    kernel = functools.partial(_seq_attention_kernel, hidden_size=hidden_size,
                               attn_span=L, nkb=nkb)

    def _kv_map(n):
        return lambda b, i, n=n: (b, i + n, 0)

    in_specs = (
        [pl.BlockSpec((1, TM, H), lambda b, i: (b, i, 0)),
         pl.BlockSpec((H, L), lambda b, i: (0, 0))]
        + [pl.BlockSpec((1, TM, H), _kv_map(n)) for n in range(nkb)]
        + [pl.BlockSpec((1, TM, H), _kv_map(n)) for n in range(nkb)]
    )

    kw = nkb * TM
    itemsize = query.dtype.itemsize
    cost = pl.CostEstimate(
        flops=int(2 * B * n_q * TM * H * (2 * kw + L)),
        transcendentals=int(B * n_q * TM * kw),
        bytes_accessed=int((2 * query.size + key.size + value.size
                            + pos_encoding.size) * itemsize),
    )

    return pl.pallas_call(
        kernel,
        out_shape=jax.ShapeDtypeStruct((B, M, H), query.dtype),
        grid=(B, n_q),
        in_specs=in_specs,
        out_specs=pl.BlockSpec((1, TM, H), lambda b, i: (b, i, 0)),
        compiler_params=pltpu.CompilerParams(
            dimension_semantics=("parallel", "parallel"),
            vmem_limit_bytes=32 * 1024 * 1024),   # explicit budget (v7x-safe)
        cost_estimate=cost,
    )(query, pos_encoding, *([key] * nkb), *([value] * nkb))


# ---------- pure-JAX reference (faithful port of the PyTorch module) ----------
def _unskew_ref(X):
    B, M, Lt = X.shape
    L = Lt - M
    Xf = X.reshape(B, -1)
    Xf = jnp.pad(Xf, ((0, 0), (0, M)))
    return Xf.reshape(B, M, M + L + 1)[:, :, :L]


def _skew_ref(X, pad_value):
    B, M, L = X.shape
    Xp = jnp.pad(X, ((0, 0), (0, 0), (0, M + 1)), constant_values=pad_value)
    Xf = Xp.reshape(B, -1)[:, :-M]
    return Xf.reshape(B, M, M + L)


def seq_attention_ref(q, k, v, pe, hidden_size):
    s = jnp.einsum('bmh,bkh->bmk', q, k)
    ctx = _unskew_ref(s)
    pos = jnp.einsum('bmh,hl->bml', q, pe)
    attn = (ctx + pos) / math.sqrt(hidden_size)
    attn = jax.nn.softmax(attn, axis=-1)
    full = _skew_ref(attn, 0.0)
    return jnp.einsum('bmk,bkh->bmh', full, v)


if __name__ == "__main__":
    # 128-aligned (lane-dense) small shapes.
    B, M, H, L = 2, 256, 128, 128   # batch(*heads), block length, hidden, span
    root = jax.random.PRNGKey(0)
    kq, kk, kv, kp = jax.random.split(root, 4)
    query = jax.random.normal(kq, (B, M, H), jnp.float32)
    key_ = jax.random.normal(kk, (B, M + L, H), jnp.float32)
    value = jax.random.normal(kv, (B, M + L, H), jnp.float32)
    pos_encoding = 0.1 * jax.random.normal(kp, (H, L), jnp.float32)

    out = seq_attention(query, key_, value, pos_encoding,
                        hidden_size=H, attn_span=L)
    out = jax.block_until_ready(out)

    ref = seq_attention_ref(query, key_, value, pos_encoding, H)
    assert out.shape == (B, M, H)
    err = float(jnp.max(jnp.abs(out - ref)))
    assert jnp.allclose(out, ref, atol=5e-3, rtol=5e-3), f"max |err| = {err}"
    print("KERNEL_OK")
</pallas_src>

<mosaic_0001>
module attributes {stable_mosaic.version = 11 : i64} {
  func.func @_seq_attention_kernel(%arg0: i32, %arg1: i32, %arg2: memref<1x128x128xf32, #tpu.memory_space<vmem>>, %arg3: memref<128x128xf32, #tpu.memory_space<vmem>>, %arg4: memref<1x128x128xf32, #tpu.memory_space<vmem>>, %arg5: memref<1x128x128xf32, #tpu.memory_space<vmem>>, %arg6: memref<1x128x128xf32, #tpu.memory_space<vmem>>, %arg7: memref<1x128x128xf32, #tpu.memory_space<vmem>>, %arg8: memref<1x128x128xf32, #tpu.memory_space<vmem>>) attributes {dimension_semantics = [#tpu.dimension_semantics<parallel>, #tpu.dimension_semantics<parallel>], iteration_bounds = array<i64: 2, 2>, scalar_prefetch = 0 : i64, scratch_operands = 0 : i64, tpu.core_type = #tpu.core_type<tc>, window_params = [{transform_indices = @transform_0, window_bounds = array<i64: 1, 128, 128>}, {pipeline_mode = #tpu.pipeline_mode<synchronous>, transform_indices = @transform_1, window_bounds = array<i64: 128, 128>}, {transform_indices = @transform_2, window_bounds = array<i64: 1, 128, 128>}, {transform_indices = @transform_3, window_bounds = array<i64: 1, 128, 128>}, {transform_indices = @transform_4, window_bounds = array<i64: 1, 128, 128>}, {transform_indices = @transform_5, window_bounds = array<i64: 1, 128, 128>}, {transform_indices = @transform_6, window_bounds = array<i64: 1, 128, 128>}]} {
    %c0 = arith.constant 0 : index
    %c0_0 = arith.constant 0 : index
    %c0_1 = arith.constant 0 : index
    %0 = vector.load %arg2[%c0, %c0_0, %c0_1] : memref<1x128x128xf32, #tpu.memory_space<vmem>>, vector<1x128x128xf32>
    %1 = vector.shape_cast %0 : vector<1x128x128xf32> to vector<128x128xf32>
    %cst = arith.constant 0.0883883461 : f32
    %2 = vector.broadcast %cst : f32 to vector<128x128xf32>
    %3 = arith.mulf %1, %2 : vector<128x128xf32>
    %c0_2 = arith.constant 0 : index
    %c0_3 = arith.constant 0 : index
    %4 = vector.load %arg3[%c0_2, %c0_3] : memref<128x128xf32, #tpu.memory_space<vmem>>, vector<128x128xf32>
    %c0_4 = arith.constant 0 : index
    %c0_5 = arith.constant 0 : index
    %c0_6 = arith.constant 0 : index
    %5 = vector.load %arg4[%c0_4, %c0_5, %c0_6] : memref<1x128x128xf32, #tpu.memory_space<vmem>>, vector<1x128x128xf32>
    %6 = vector.shape_cast %5 : vector<1x128x128xf32> to vector<128x128xf32>
    %cst_7 = arith.constant dense<0.000000e+00> : vector<128x128xf32>
    %7 = tpu.matmul %3, %6, %cst_7 {dimension_numbers = #tpu.dot_dimension_numbers<[1], [1], [0], [0], [0, 0, 1, 0], [], []>} : vector<128x128xf32>, vector<128x128xf32>, vector<128x128xf32> -> vector<128x128xf32>
    %c0_8 = arith.constant 0 : index
    %c0_9 = arith.constant 0 : index
    %c0_10 = arith.constant 0 : index
    %8 = vector.load %arg5[%c0_8, %c0_9, %c0_10] : memref<1x128x128xf32, #tpu.memory_space<vmem>>, vector<1x128x128xf32>
    %9 = vector.shape_cast %8 : vector<1x128x128xf32> to vector<128x128xf32>
    %cst_11 = arith.constant dense<0.000000e+00> : vector<128x128xf32>
    %10 = tpu.matmul %3, %9, %cst_11 {dimension_numbers = #tpu.dot_dimension_numbers<[1], [1], [0], [0], [0, 0, 1, 0], [], []>} : vector<128x128xf32>, vector<128x128xf32>, vector<128x128xf32> -> vector<128x128xf32>
    %11 = tpu.concatenate %7, %10 in 1 : vector<128x128xf32>, vector<128x128xf32> -> vector<128x256xf32>
    %cst_12 = arith.constant dense<0.000000e+00> : vector<128x128xf32>
    %12 = tpu.matmul %3, %4, %cst_12 {dimension_numbers = #tpu.dot_dimension_numbers<[1], [0], [0], [1], [0, 0, 1, 1], [], []>} : vector<128x128xf32>, vector<128x128xf32>, vector<128x128xf32> -> vector<128x128xf32>
    %13 = tpu.iota {dimensions = array<i32: 0>} : vector<128x256xi32>
    %14 = tpu.iota {dimensions = array<i32: 1>} : vector<128x256xi32>
    %15 = arith.subi %14, %13 : vector<128x256xi32>
    %c0_i32 = arith.constant 0 : i32
    %16 = vector.broadcast %c0_i32 : i32 to vector<128x256xi32>
    %17 = arith.cmpi sge, %15, %16 : vector<128x256xi32>
    %c128_i32 = arith.constant 128 : i32
    %18 = vector.broadcast %c128_i32 : i32 to vector<128x256xi32>
    %19 = arith.cmpi slt, %15, %18 : vector<128x256xi32>
    %20 = arith.andi %17, %19 : vector<128x256xi1>
    %cst_13 = arith.constant 0.000000e+00 : f32
    %21 = vector.broadcast %cst_13 : f32 to vector<128x128xf32>
    %22 = tpu.concatenate %12, %21 in 1 : vector<128x128xf32>, vector<128x128xf32> -> vector<128x256xf32>
    %c0_i32_14 = arith.constant 0 : i32
    %23 = tpu.dynamic_rotate %22 by %c0_i32_14 dim 1 {stride = 1 : si32, stride_dimension = 0 : si32} : vector<128x256xf32>, i32 -> vector<128x256xf32>
    %24 = arith.addf %11, %23 : vector<128x256xf32>
    %cst_15 = arith.constant 0xFF800000 : f32
    %25 = vector.broadcast %cst_15 : f32 to vector<128x256xf32>
    %26 = arith.select %20, %24, %25 : vector<128x256xi1>, vector<128x256xf32>
    %cst_16 = arith.constant dense<0xFF800000> : vector<128xf32>
    %27 = vector.multi_reduction <maximumf>, %26, %cst_16 [1] : vector<128x256xf32> to vector<128xf32>
    %28 = vector.shape_cast %27 : vector<128xf32> to vector<128x1xf32>
    %29 = vector.broadcast %28 : vector<128x1xf32> to vector<128x256xf32>
    %30 = arith.subf %26, %29 : vector<128x256xf32>
    %31 = math.exp %30 : vector<128x256xf32>
    %cst_17 = arith.constant 0.000000e+00 : f32
    %32 = vector.broadcast %cst_17 : f32 to vector<128x256xf32>
    %33 = arith.select %20, %31, %32 : vector<128x256xi1>, vector<128x256xf32>
    %cst_18 = arith.constant dense<0.000000e+00> : vector<128xf32>
    %34 = vector.multi_reduction <add>, %33, %cst_18 [1] : vector<128x256xf32> to vector<128xf32>
    %35 = vector.shape_cast %34 : vector<128xf32> to vector<128x1xf32>
    %36 = tpu.reciprocal %35 {approx = true} : vector<128x1xf32> -> vector<128x1xf32>
    %37 = vector.broadcast %36 : vector<128x1xf32> to vector<128x256xf32>
    %38 = arith.mulf %33, %37 : vector<128x256xf32>
    %39 = vector.extract_strided_slice %38 {offsets = [0, 0], sizes = [128, 128], strides = [1, 1]} : vector<128x256xf32> to vector<128x128xf32>
    %c0_19 = arith.constant 0 : index
    %c0_20 = arith.constant 0 : index
    %c0_21 = arith.constant 0 : index
    %40 = vector.load %arg6[%c0_19, %c0_20, %c0_21] : memref<1x128x128xf32, #tpu.memory_space<vmem>>, vector<1x128x128xf32>
    %41 = vector.shape_cast %40 : vector<1x128x128xf32> to vector<128x128xf32>
    %cst_22 = arith.constant dense<0.000000e+00> : vector<128x128xf32>
    %42 = tpu.matmul %39, %41, %cst_22 {dimension_numbers = #tpu.dot_dimension_numbers<[1], [0], [0], [1], [0, 0, 1, 1], [], []>} : vector<128x128xf32>, vector<128x128xf32>, vector<128x128xf32> -> vector<128x128xf32>
    %43 = vector.extract_strided_slice %38 {offsets = [0, 128], sizes = [128, 128], strides = [1, 1]} : vector<128x256xf32> to vector<128x128xf32>
    %c0_23 = arith.constant 0 : index
    %c0_24 = arith.constant 0 : index
    %c0_25 = arith.constant 0 : index
    %44 = vector.load %arg7[%c0_23, %c0_24, %c0_25] : memref<1x128x128xf32, #tpu.memory_space<vmem>>, vector<1x128x128xf32>
    %45 = vector.shape_cast %44 : vector<1x128x128xf32> to vector<128x128xf32>
    %cst_26 = arith.constant dense<0.000000e+00> : vector<128x128xf32>
    %46 = tpu.matmul %43, %45, %cst_26 {dimension_numbers = #tpu.dot_dimension_numbers<[1], [0], [0], [1], [0, 0, 1, 1], [], []>} : vector<128x128xf32>, vector<128x128xf32>, vector<128x128xf32> -> vector<128x128xf32>
    %47 = arith.addf %42, %46 : vector<128x128xf32>
    %c0_27 = arith.constant 0 : index
    %c0_28 = arith.constant 0 : index
    %c0_29 = arith.constant 0 : index
    %48 = vector.load %arg8[%c0_27, %c0_28, %c0_29] : memref<1x128x128xf32, #tpu.memory_space<vmem>>, vector<1x128x128xf32>
    %49 = vector.shape_cast %48 : vector<1x128x128xf32> to vector<128x128xf32>
    %50 = vector.shape_cast %47 : vector<128x128xf32> to vector<1x128x128xf32>
    tpu.vector_store %arg8[%c0_27, %c0_28, %c0_29], %50 {strides = array<i32>} : memref<1x128x128xf32, #tpu.memory_space<vmem>>, vector<1x128x128xf32>,
    return
  }
  func.func @transform_0(%arg0: i32, %arg1: i32) -> (i32, i32, i32) {
    %c0_i32 = arith.constant 0 : i32
    %c0_i32_0 = arith.constant 0 : i32
    return %arg0, %arg1, %c0_i32 : i32, i32, i32
  }
  func.func @transform_1(%arg0: i32, %arg1: i32) -> (i32, i32) {
    %c0_i32 = arith.constant 0 : i32
    %c0_i32_0 = arith.constant 0 : i32
    %c0_i32_1 = arith.constant 0 : i32
    return %c0_i32, %c0_i32_0 : i32, i32
  }
  func.func @transform_2(%arg0: i32, %arg1: i32) -> (i32, i32, i32) {
    %c0_i32 = arith.constant 0 : i32
    %0 = arith.addi %arg1, %c0_i32 : i32
    %c0_i32_0 = arith.constant 0 : i32
    %c0_i32_1 = arith.constant 0 : i32
    return %arg0, %0, %c0_i32_0 : i32, i32, i32
  }
  func.func @transform_3(%arg0: i32, %arg1: i32) -> (i32, i32, i32) {
    %c1_i32 = arith.constant 1 : i32
    %0 = arith.addi %arg1, %c1_i32 : i32
    %c0_i32 = arith.constant 0 : i32
    %c0_i32_0 = arith.constant 0 : i32
    return %arg0, %0, %c0_i32 : i32, i32, i32
  }
  func.func @transform_4(%arg0: i32, %arg1: i32) -> (i32, i32, i32) {
    %c0_i32 = arith.constant 0 : i32
    %0 = arith.addi %arg1, %c0_i32 : i32
    %c0_i32_0 = arith.constant 0 : i32
    %c0_i32_1 = arith.constant 0 : i32
    return %arg0, %0, %c0_i32_0 : i32, i32, i32
  }
  func.func @transform_5(%arg0: i32, %arg1: i32) -> (i32, i32, i32) {
    %c1_i32 = arith.constant 1 : i32
    %0 = arith.addi %arg1, %c1_i32 : i32
    %c0_i32 = arith.constant 0 : i32
    %c0_i32_0 = arith.constant 0 : i32
    return %arg0, %0, %c0_i32 : i32, i32, i32
  }
  func.func @transform_6(%arg0: i32, %arg1: i32) -> (i32, i32, i32) {
    %c0_i32 = arith.constant 0 : i32
    %c0_i32_0 = arith.constant 0 : i32
    return %arg0, %arg1, %c0_i32 : i32, i32, i32
  }
}

</mosaic_0001>

<llo_original>
// kernel: tpu_custom_call.1
$region0: #{tpu_custom_call.1}
  #allocation0 [shape = 'u32[]', space=smem, size = 0x4, offset = 0x4, fixed_abs, tag = 'smem constant byte address 0x4 - core index']
  #allocation1 [shape = 'u32[144,128]{1,0:T(1,128)}', space=vmem, size = 0x12000, scoped, tag = 'internal scratch']
  %s0 = inlined_call_operand.hbm [shape: f32[2,256,128], index: 0, kind: input, shape index: {}]
  %s1 = inlined_call_operand.hbm [shape: f32[128,128], index: 1, kind: input, shape index: {}]
  %s2 = inlined_call_operand.hbm [shape: f32[2,384,128], index: 2, kind: input, shape index: {}]
  %s3 = inlined_call_operand.hbm [shape: f32[2,384,128], index: 3, kind: input, shape index: {}]
  %s4 = inlined_call_operand.hbm [shape: f32[2,384,128], index: 4, kind: input, shape index: {}]
  %s5 = inlined_call_operand.hbm [shape: f32[2,384,128], index: 5, kind: input, shape index: {}]
  %s6 = inlined_call_operand.hbm [shape: f32[2,256,128], index: 6, kind: output, shape index: {}]
  %s7 = sld [smem:[#allocation0]]
  $region81: #{tpu_custom_call.1} parent=0
    _
  %s9 = ssub.s32 1, %s7
  %s10 = scalar_select 0, %s9, %s7
  $region1: #{tpu_custom_call.1} parent=0
    #allocation2 [shape = 'u8[131072]{0}', space=vmem, size = 0x20000, scoped, tag = 'input window, operand 0']
    #allocation3 [shape = 's32[2]{0}', space=sflag, size = 0x8, scoped, tag = 'scoped memory for tpu_custom_call.1']
    #allocation4 [shape = 's32[2]{0}', space=sflag, size = 0x8, scoped, tag = 'scoped memory for tpu_custom_call.1']
    #allocation5 [shape = 'u8[65536]{0}', space=vmem, size = 0x10000, scoped, tag = 'input window, operand 1, single buffered']
    #allocation6 [shape = 's32[1]{0}', space=sflag, size = 0x4, scoped, tag = 'scoped memory for tpu_custom_call.1']
    #allocation7 [shape = 'u8[131072]{0}', space=vmem, size = 0x20000, scoped, tag = 'input window, operand 2']
    #allocation8 [shape = 'u8[131072]{0}', space=vmem, size = 0x20000, scoped, tag = 'input window, operand 3']
    #allocation9 [shape = 'u8[131072]{0}', space=vmem, size = 0x20000, scoped, tag = 'input window, operand 4']
    #allocation10 [shape = 'u8[131072]{0}', space=vmem, size = 0x20000, scoped, tag = 'input window, operand 5']
    #allocation11 [shape = 'u8[131072]{0}', space=vmem, size = 0x20000, scoped, tag = 'output window, operand 0']
    %11 = vsyncpa [#allocation3], 0
    %s12 = scalar_lea.sflag [#allocation3], 1
    %13 = vsyncpa %s12, 0
    %14 = vsyncpa [#allocation6], 0
    %15 = vsyncpa [#allocation4], 0
    %s16 = scalar_lea.sflag [#allocation4], 1
    %17 = vsyncpa %s16, 0
    loop: start=0, step=1, limit=6
    $region2: #{tpu_custom_call.1} parent=1 // loop_pre_header
      _
    $region3: #{tpu_custom_call.1} parent=1 // loop_header
      %s19 = sphi 0, %s23
      %p20 = scmp.ge.s32.totalorder %s19, 6
      %s26 = sphi 0, %s38
      %s27 = sphi 0, %s34
      %s28 = sphi 0, %s26
      %s29 = sphi 0, %s27
      %s30 = sphi 0, %s28
      %s31 = sphi 0, %s29
      %s43 = sphi 0, %s45
      %s46 = sphi 0, %s43
      %s47 = sphi 0, %s46
      %s63 = sphi 0, %s47
      %s67 = sphi 0, %s67
      %s69 = sphi 0, %s67
      %s70 = sphi 0, %s69
      %s84 = sphi 0, %s70
      %s92 = sphi 0, %s94
      %s95 = sphi 0, %s92
      %s96 = sphi 0, %s95
      %s112 = sphi 0, %s96
      %s122 = sphi 0, %s124
      %s125 = sphi 0, %s122
      %s126 = sphi 0, %s125
      %s142 = sphi 0, %s126
      %s150 = sphi 0, %s152
      %s153 = sphi 0, %s150
      %s154 = sphi 0, %s153
      %s170 = sphi 0, %s154
      %s180 = sphi 0, %s182
      %s183 = sphi 0, %s180
      %s184 = sphi 0, %s183
      %s200 = sphi 0, %s184
      %s208 = sphi 0, %s210
      %s211 = sphi 0, %s208
      %s212 = sphi 0, %s211
      %s228 = sphi 0, %s212
    $region4: #{tpu_custom_call.1} parent=1 // loop_header_branch
      %22 = sbr.rel (%p20) target = $region8
    $region5: #{tpu_custom_call.1} parent=1 // loop_body
      %s24 = ssub.s32 %s19, 1
      %s25 = ssub.s32 %s19, 2
      %s32 = sadd.s32 1, %s27
      %p33 = scmp.ge.s32.totalorder %s32, 2
      %s34 = scalar_select %p33, 0, %s32
      %s35 = sadd.s32 1, %s26
      %s36 = scalar_select %p33, %s35, %s26
      %p37 = scmp.ge.s32.totalorder %s36, 2
      %s38 = scalar_select %p37, 0, %s36
      %s39 = ssub.s32 %s26, %s38
      %s40 = ssub.s32 %s27, %s34
      %s41 = sor.u32 %s39, %s40
      %p42 = scmp.eq.s32.totalorder %s41, 0
      %s44 = sadd.s32 %s43, 1
      %s45 = scalar_select %p42, %s43, %s44
      %p48 = pneg %p42
      %p49 = scmp.eq.s32.totalorder %s19, 3
      %p50 = por %p48, %p49
      %p51 = scmp.ne.s32.totalorder %s43, %s46
      %p52 = scmp.eq.s32.totalorder %s19, 0
      %p53 = por %p51, %p52
      %p54 = scmp.ne.s32.totalorder %s43, %s46
      %p55 = scmp.eq.s32.totalorder %s24, 3
      %p56 = por %p54, %p55
      %p57 = scmp.ne.s32.totalorder %s46, %s47
      %p58 = scmp.eq.s32.totalorder %s24, 0
      %p59 = por %p57, %p58
      %p60 = scmp.ne.s32.totalorder %s46, %s47
      %p61 = scmp.eq.s32.totalorder %s25, 3
      %p62 = por %p60, %p61
      %p64 = scmp.ne.s32.totalorder %s47, %s63
      %p65 = scmp.eq.s32.totalorder %s25, 0
      %p66 = por %p64, %p65
      %s68 = sadd.s32 %s67, 1
      %p71 = scmp.eq.s32.totalorder %s19, 3
      %p72 = scmp.ne.s32.totalorder %s67, %s69
      %p73 = scmp.eq.s32.totalorder %s19, 0
      %p74 = por %p72, %p73
      %p75 = scmp.ne.s32.totalorder %s67, %s69
      %p76 = scmp.eq.s32.totalorder %s24, 3
      %p77 = por %p75, %p76
      %p78 = scmp.ne.s32.totalorder %s69, %s70
      %p79 = scmp.eq.s32.totalorder %s24, 0
      %p80 = por %p78, %p79
      %p81 = scmp.ne.s32.totalorder %s69, %s70
      %p82 = scmp.eq.s32.totalorder %s25, 3
      %p83 = por %p81, %p82
      %p85 = scmp.ne.s32.totalorder %s70, %s84
      %p86 = scmp.eq.s32.totalorder %s25, 0
      %p87 = por %p85, %p86
      %s88 = ssub.s32 %s26, %s38
      %s89 = ssub.s32 %s27, %s34
      %s90 = sor.u32 %s88, %s89
      %p91 = scmp.eq.s32.totalorder %s90, 0
      %s93 = sadd.s32 %s92, 1
      %s94 = scalar_select %p91, %s92, %s93
      %p97 = pneg %p91
      %p98 = scmp.eq.s32.totalorder %s19, 3
      %p99 = por %p97, %p98
      %p100 = scmp.ne.s32.totalorder %s92, %s95
      %p101 = scmp.eq.s32.totalorder %s19, 0
      %p102 = por %p100, %p101
      %p103 = scmp.ne.s32.totalorder %s92, %s95
      %p104 = scmp.eq.s32.totalorder %s24, 3
      %p105 = por %p103, %p104
      %p106 = scmp.ne.s32.totalorder %s95, %s96
      %p107 = scmp.eq.s32.totalorder %s24, 0
      %p108 = por %p106, %p107
      %p109 = scmp.ne.s32.totalorder %s95, %s96
      %p110 = scmp.eq.s32.totalorder %s25, 3
      %p111 = por %p109, %p110
      %p113 = scmp.ne.s32.totalorder %s96, %s112
      %p114 = scmp.eq.s32.totalorder %s25, 0
      %p115 = por %p113, %p114
      %s116 = sadd.s32 %s27, 1
      %s117 = sadd.s32 %s34, 1
      %s118 = ssub.s32 %s26, %s38
      %s119 = ssub.s32 %s116, %s117
      %s120 = sor.u32 %s118, %s119
      %p121 = scmp.eq.s32.totalorder %s120, 0
      %s123 = sadd.s32 %s122, 1
      %s124 = scalar_select %p121, %s122, %s123
      %p127 = pneg %p121
      %p128 = scmp.eq.s32.totalorder %s19, 3
      %p129 = por %p127, %p128
      %p130 = scmp.ne.s32.totalorder %s122, %s125
      %p131 = scmp.eq.s32.totalorder %s19, 0
      %p132 = por %p130, %p131
      %p133 = scmp.ne.s32.totalorder %s122, %s125
      %p134 = scmp.eq.s32.totalorder %s24, 3
      %p135 = por %p133, %p134
      %p136 = scmp.ne.s32.totalorder %s125, %s126
      %p137 = scmp.eq.s32.totalorder %s24, 0
      %p138 = por %p136, %p137
      %p139 = scmp.ne.s32.totalorder %s125, %s126
      %p140 = scmp.eq.s32.totalorder %s25, 3
      %p141 = por %p139, %p140
      %p143 = scmp.ne.s32.totalorder %s126, %s142
      %p144 = scmp.eq.s32.totalorder %s25, 0
      %p145 = por %p143, %p144
      %s146 = ssub.s32 %s26, %s38
      %s147 = ssub.s32 %s27, %s34
      %s148 = sor.u32 %s146, %s147
      %p149 = scmp.eq.s32.totalorder %s148, 0
      %s151 = sadd.s32 %s150, 1
      %s152 = scalar_select %p149, %s150, %s151
      %p155 = pneg %p149
      %p156 = scmp.eq.s32.totalorder %s19, 3
      %p157 = por %p155, %p156
      %p158 = scmp.ne.s32.totalorder %s150, %s153
      %p159 = scmp.eq.s32.totalorder %s19, 0
      %p160 = por %p158, %p159
      %p161 = scmp.ne.s32.totalorder %s150, %s153
      %p162 = scmp.eq.s32.totalorder %s24, 3
      %p163 = por %p161, %p162
      %p164 = scmp.ne.s32.totalorder %s153, %s154
      %p165 = scmp.eq.s32.totalorder %s24, 0
      %p166 = por %p164, %p165
      %p167 = scmp.ne.s32.totalorder %s153, %s154
      %p168 = scmp.eq.s32.totalorder %s25, 3
      %p169 = por %p167, %p168
      %p171 = scmp.ne.s32.totalorder %s154, %s170
      %p172 = scmp.eq.s32.totalorder %s25, 0
      %p173 = por %p171, %p172
      %s174 = sadd.s32 %s27, 1
      %s175 = sadd.s32 %s34, 1
      %s176 = ssub.s32 %s26, %s38
      %s177 = ssub.s32 %s174, %s175
      %s178 = sor.u32 %s176, %s177
      %p179 = scmp.eq.s32.totalorder %s178, 0
      %s181 = sadd.s32 %s180, 1
      %s182 = scalar_select %p179, %s180, %s181
      %p185 = pneg %p179
      %p186 = scmp.eq.s32.totalorder %s19, 3
      %p187 = por %p185, %p186
      %p188 = scmp.ne.s32.totalorder %s180, %s183
      %p189 = scmp.eq.s32.totalorder %s19, 0
      %p190 = por %p188, %p189
      %p191 = scmp.ne.s32.totalorder %s180, %s183
      %p192 = scmp.eq.s32.totalorder %s24, 3
      %p193 = por %p191, %p192
      %p194 = scmp.ne.s32.totalorder %s183, %s184
      %p195 = scmp.eq.s32.totalorder %s24, 0
      %p196 = por %p194, %p195
      %p197 = scmp.ne.s32.totalorder %s183, %s184
      %p198 = scmp.eq.s32.totalorder %s25, 3
      %p199 = por %p197, %p198
      %p201 = scmp.ne.s32.totalorder %s184, %s200
      %p202 = scmp.eq.s32.totalorder %s25, 0
      %p203 = por %p201, %p202
      %s204 = ssub.s32 %s26, %s38
      %s205 = ssub.s32 %s27, %s34
      %s206 = sor.u32 %s204, %s205
      %p207 = scmp.eq.s32.totalorder %s206, 0
      %s209 = sadd.s32 %s208, 1
      %s210 = scalar_select %p207, %s208, %s209
      %p213 = pneg %p207
      %p214 = scmp.eq.s32.totalorder %s19, 3
      %p215 = por %p213, %p214
      %p216 = scmp.ne.s32.totalorder %s208, %s211
      %p217 = scmp.eq.s32.totalorder %s19, 0
      %p218 = por %p216, %p217
      %p219 = scmp.ne.s32.totalorder %s208, %s211
      %p220 = scmp.eq.s32.totalorder %s24, 3
      %p221 = por %p219, %p220
      %p222 = scmp.ne.s32.totalorder %s211, %s212
      %p223 = scmp.eq.s32.totalorder %s24, 0
      %p224 = por %p222, %p223
      %p225 = scmp.ne.s32.totalorder %s211, %s212
      %p226 = scmp.eq.s32.totalorder %s25, 3
      %p227 = por %p225, %p226
      %p229 = scmp.ne.s32.totalorder %s212, %s228
      %p230 = scmp.eq.s32.totalorder %s25, 0
      %p231 = por %p229, %p230
      %p232 = scmp.le.s32.totalorder 1, %s19
      %p233 = scmp.lt.s32.totalorder %s19, 5
      %p234 = pnand %p232, %p233
      %p235 = pneg %p234
      // Predicated region
      $region9: #{tpu_custom_call.1} parent=5 // pred_check
        _
      $region10: #{tpu_custom_call.1} parent=5 // pred_check_branch
        %237 = sbr.rel (%p234) target = $region12
      $region11: #{tpu_custom_call.1} parent=5 // pred_region
        %s238 = ssub.s32 %s19, 1
        // Predicated region
        $region13: #{tpu_custom_call.1} parent=11 // pred_check
          %p239 = pneg %p80
        $region14: #{tpu_custom_call.1} parent=11 // pred_check_branch
          %241 = sbr.rel (%p239) target = $region16
        $region15: #{tpu_custom_call.1} parent=11 // pred_region
          %s243 = ssub.s32 2048, 2048
          %244 = vsyncadd [#allocation6], %s243
          %s245 = sshll.u32 [#allocation5], 4
          %s246 = int_to_ptr.vmem [resolvable:$true] %s245
          %251 = dma.hbm_to_vmem [thread:$0]  %s1, 2048, %s246, [#allocation6], 128, 128, 8
        $region16: #{tpu_custom_call.1} parent=11 // pred_fallthru
          _
      $region12: #{tpu_custom_call.1} parent=5 // pred_fallthru
        _
      %p252 = scmp.lt.s32.totalorder %s19, 4
      // Predicated region
      $region17: #{tpu_custom_call.1} parent=5 // pred_check
        %p253 = pneg %p252
      $region18: #{tpu_custom_call.1} parent=5 // pred_check_branch
        %255 = sbr.rel (%p253) target = $region20
      $region19: #{tpu_custom_call.1} parent=5 // pred_region
        // Predicated region
        $region21: #{tpu_custom_call.1} parent=19 // pred_check
          %p256 = pneg %p53
        $region22: #{tpu_custom_call.1} parent=19 // pred_check_branch
          %258 = sbr.rel (%p256) target = $region24
        $region23: #{tpu_custom_call.1} parent=19 // pred_region
          %s259 = sand.u32 %s19, 1
          %s260 = scalar_lea.sflag [#allocation3], %s259
          %s261 = sand.u32 %s43, 1
          %s262 = smul.addr %s261, 128
          %s263 = scalar_lea.vmem [#allocation2], %s262
          %s264 = smul.u32 16, %s27
          %s266 = ssub.s32 2048, 2048
          %267 = vsyncadd %s260, %s266
          %s268 = smul.addr %s26, 32
          %s269 = sadd.s32 %s264, %s268
          %s270 = smul.addr %s269, 128
          %s271 = scalar_lea.hbm %s0, %s270
          %s272 = sshll.u32 %s263, 4
          %s273 = int_to_ptr.vmem [resolvable:$true] %s272
          %278 = dma.hbm_to_vmem [thread:$0]  %s271, 2048, %s273, %s260, 128, 128, 8
        $region24: #{tpu_custom_call.1} parent=19 // pred_fallthru
          _
        // Predicated region
        $region25: #{tpu_custom_call.1} parent=19 // pred_check
          %p279 = pneg %p102
        $region26: #{tpu_custom_call.1} parent=19 // pred_check_branch
          %281 = sbr.rel (%p279) target = $region28
        $region27: #{tpu_custom_call.1} parent=19 // pred_region
          %s282 = sand.u32 %s19, 1
          %s283 = scalar_lea.sflag [#allocation3], %s282
          %s284 = sand.u32 %s92, 1
          %s285 = smul.addr %s284, 128
          %s286 = scalar_lea.vmem [#allocation7], %s285
          %s287 = smul.u32 16, %s27
          %s289 = ssub.s32 2048, 2048
          %290 = vsyncadd %s283, %s289
          %s291 = smul.addr %s26, 48
          %s292 = sadd.s32 %s287, %s291
          %s293 = smul.addr %s292, 128
          %s294 = scalar_lea.hbm %s2, %s293
          %s295 = sshll.u32 %s286, 4
          %s296 = int_to_ptr.vmem [resolvable:$true] %s295
          %301 = dma.hbm_to_vmem [thread:$0]  %s294, 2048, %s296, %s283, 128, 128, 8
        $region28: #{tpu_custom_call.1} parent=19 // pred_fallthru
          _
        // Predicated region
        $region29: #{tpu_custom_call.1} parent=19 // pred_check
          %p302 = pneg %p132
        $region30: #{tpu_custom_call.1} parent=19 // pred_check_branch
          %304 = sbr.rel (%p302) target = $region32
        $region31: #{tpu_custom_call.1} parent=19 // pred_region
          %s305 = sand.u32 %s19, 1
          %s306 = scalar_lea.sflag [#allocation3], %s305
          %s307 = sand.u32 %s122, 1
          %s308 = smul.addr %s307, 128
          %s309 = scalar_lea.vmem [#allocation8], %s308
          %s310 = sadd.s32 %s27, 1
          %s311 = smul.u32 16, %s310
          %s313 = ssub.s32 2048, 2048
          %314 = vsyncadd %s306, %s313
          %s315 = smul.addr %s26, 48
          %s316 = sadd.s32 %s311, %s315
          %s317 = smul.addr %s316, 128
          %s318 = scalar_lea.hbm %s3, %s317
          %s319 = sshll.u32 %s309, 4
          %s320 = int_to_ptr.vmem [resolvable:$true] %s319
          %325 = dma.hbm_to_vmem [thread:$0]  %s318, 2048, %s320, %s306, 128, 128, 8
        $region32: #{tpu_custom_call.1} parent=19 // pred_fallthru
          _
        // Predicated region
        $region33: #{tpu_custom_call.1} parent=19 // pred_check
          %p326 = pneg %p160
        $region34: #{tpu_custom_call.1} parent=19 // pred_check_branch
          %328 = sbr.rel (%p326) target = $region36
        $region35: #{tpu_custom_call.1} parent=19 // pred_region
          %s329 = sand.u32 %s19, 1
          %s330 = scalar_lea.sflag [#allocation3], %s329
          %s331 = sand.u32 %s150, 1
          %s332 = smul.addr %s331, 128
          %s333 = scalar_lea.vmem [#allocation9], %s332
          %s334 = smul.u32 16, %s27
          %s336 = ssub.s32 2048, 2048
          %337 = vsyncadd %s330, %s336
          %s338 = smul.addr %s26, 48
          %s339 = sadd.s32 %s334, %s338
          %s340 = smul.addr %s339, 128
          %s341 = scalar_lea.hbm %s4, %s340
          %s342 = sshll.u32 %s333, 4
          %s343 = int_to_ptr.vmem [resolvable:$true] %s342
          %348 = dma.hbm_to_vmem [thread:$0]  %s341, 2048, %s343, %s330, 128, 128, 8
        $region36: #{tpu_custom_call.1} parent=19 // pred_fallthru
          _
        // Predicated region
        $region37: #{tpu_custom_call.1} parent=19 // pred_check
          %p349 = pneg %p190
        $region38: #{tpu_custom_call.1} parent=19 // pred_check_branch
          %351 = sbr.rel (%p349) target = $region40
        $region39: #{tpu_custom_call.1} parent=19 // pred_region
          %s352 = sand.u32 %s19, 1
          %s353 = scalar_lea.sflag [#allocation3], %s352
          %s354 = sand.u32 %s180, 1
          %s355 = smul.addr %s354, 128
          %s356 = scalar_lea.vmem [#allocation10], %s355
          %s357 = sadd.s32 %s27, 1
          %s358 = smul.u32 16, %s357
          %s360 = ssub.s32 2048, 2048
          %361 = vsyncadd %s353, %s360
          %s362 = smul.addr %s26, 48
          %s363 = sadd.s32 %s358, %s362
          %s364 = smul.addr %s363, 128
          %s365 = scalar_lea.hbm %s5, %s364
          %s366 = sshll.u32 %s356, 4
          %s367 = int_to_ptr.vmem [resolvable:$true] %s366
          %372 = dma.hbm_to_vmem [thread:$0]  %s365, 2048, %s367, %s353, 128, 128, 8
        $region40: #{tpu_custom_call.1} parent=19 // pred_fallthru
          _
      $region20: #{tpu_custom_call.1} parent=5 // pred_fallthru
        _
      %p373 = scmp.le.s32.totalorder 1, %s19
      %p374 = scmp.lt.s32.totalorder %s19, 5
      %p375 = pnand %p373, %p374
      %p376 = pneg %p375
      // Predicated region
      $region41: #{tpu_custom_call.1} parent=5 // pred_check
        _
      $region42: #{tpu_custom_call.1} parent=5 // pred_check_branch
        %378 = sbr.rel (%p375) target = $region44
      $region43: #{tpu_custom_call.1} parent=5 // pred_region
        %s379 = ssub.s32 %s19, 1
        %s380 = sand.u32 %s24, 1
        %s381 = scalar_lea.sflag [#allocation3], %s380
        %s382 = sand.u32 %s46, 1
        %s383 = smul.addr %s382, 128
        %s384 = scalar_lea.vmem [#allocation2], %s383
        // Predicated region
        $region45: #{tpu_custom_call.1} parent=43 // pred_check
          %p385 = pneg %p59
        $region46: #{tpu_custom_call.1} parent=43 // pred_check_branch
          %387 = sbr.rel (%p385) target = $region48
        $region47: #{tpu_custom_call.1} parent=43 // pred_region
          %388 = dma.done %s381, 2048
        $region48: #{tpu_custom_call.1} parent=43 // pred_fallthru
          _
        // Predicated region
        $region49: #{tpu_custom_call.1} parent=43 // pred_check
          %p389 = pneg %p80
        $region50: #{tpu_custom_call.1} parent=43 // pred_check_branch
          %391 = sbr.rel (%p389) target = $region52
        $region51: #{tpu_custom_call.1} parent=43 // pred_region
          %392 = dma.done [#allocation6], 2048
        $region52: #{tpu_custom_call.1} parent=43 // pred_fallthru
          _
        %s393 = sand.u32 %s24, 1
        %s394 = scalar_lea.sflag [#allocation3], %s393
        %s395 = sand.u32 %s95, 1
        %s396 = smul.addr %s395, 128
        %s397 = scalar_lea.vmem [#allocation7], %s396
        // Predicated region
        $region53: #{tpu_custom_call.1} parent=43 // pred_check
          %p398 = pneg %p108
        $region54: #{tpu_custom_call.1} parent=43 // pred_check_branch
          %400 = sbr.rel (%p398) target = $region56
        $region55: #{tpu_custom_call.1} parent=43 // pred_region
          %401 = dma.done %s394, 2048
        $region56: #{tpu_custom_call.1} parent=43 // pred_fallthru
          _
        %s402 = sand.u32 %s24, 1
        %s403 = scalar_lea.sflag [#allocation3], %s402
        %s404 = sand.u32 %s125, 1
        %s405 = smul.addr %s404, 128
        %s406 = scalar_lea.vmem [#allocation8], %s405
        // Predicated region
        $region57: #{tpu_custom_call.1} parent=43 // pred_check
          %p407 = pneg %p138
        $region58: #{tpu_custom_call.1} parent=43 // pred_check_branch
          %409 = sbr.rel (%p407) target = $region60
        $region59: #{tpu_custom_call.1} parent=43 // pred_region
          %410 = dma.done %s403, 2048
        $region60: #{tpu_custom_call.1} parent=43 // pred_fallthru
          _
        %s411 = sand.u32 %s24, 1
        %s412 = scalar_lea.sflag [#allocation3], %s411
        %s413 = sand.u32 %s153, 1
        %s414 = smul.addr %s413, 128
        %s415 = scalar_lea.vmem [#allocation9], %s414
        // Predicated region
        $region61: #{tpu_custom_call.1} parent=43 // pred_check
          %p416 = pneg %p166
        $region62: #{tpu_custom_call.1} parent=43 // pred_check_branch
          %418 = sbr.rel (%p416) target = $region64
        $region63: #{tpu_custom_call.1} parent=43 // pred_region
          %419 = dma.done %s412, 2048
        $region64: #{tpu_custom_call.1} parent=43 // pred_fallthru
          _
        %s420 = sand.u32 %s24, 1
        %s421 = scalar_lea.sflag [#allocation3], %s420
        %s422 = sand.u32 %s183, 1
        %s423 = smul.addr %s422, 128
        %s424 = scalar_lea.vmem [#allocation10], %s423
        // Predicated region
        $region65: #{tpu_custom_call.1} parent=43 // pred_check
          %p425 = pneg %p196
        $region66: #{tpu_custom_call.1} parent=43 // pred_check_branch
          %427 = sbr.rel (%p425) target = $region68
        $region67: #{tpu_custom_call.1} parent=43 // pred_region
          %428 = dma.done %s421, 2048
        $region68: #{tpu_custom_call.1} parent=43 // pred_fallthru
          _
        %s429 = sand.u32 %s24, 1
        %s430 = scalar_lea.sflag [#allocation3], %s429
        %s431 = sand.u32 %s46, 1
        %s432 = smul.addr %s431, 128
        %s433 = scalar_lea.vmem [#allocation2], %s432
        %p434 = pneg %p59
        %p435 = pneg %p56
        %p436 = pneg %p80
        %p437 = pneg %p77
        %s438 = sand.u32 %s24, 1
        %s439 = scalar_lea.sflag [#allocation3], %s438
        %s440 = sand.u32 %s95, 1
        %s441 = smul.addr %s440, 128
        %s442 = scalar_lea.vmem [#allocation7], %s441
        %p443 = pneg %p108
        %p444 = pneg %p105
        %s445 = sand.u32 %s24, 1
        %s446 = scalar_lea.sflag [#allocation3], %s445
        %s447 = sand.u32 %s125, 1
        %s448 = smul.addr %s447, 128
        %s449 = scalar_lea.vmem [#allocation8], %s448
        %p450 = pneg %p138
        %p451 = pneg %p135
        %s452 = sand.u32 %s24, 1
        %s453 = scalar_lea.sflag [#allocation3], %s452
        %s454 = sand.u32 %s153, 1
        %s455 = smul.addr %s454, 128
        %s456 = scalar_lea.vmem [#allocation9], %s455
        %p457 = pneg %p166
        %p458 = pneg %p163
        %s459 = sand.u32 %s24, 1
        %s460 = scalar_lea.sflag [#allocation3], %s459
        %s461 = sand.u32 %s183, 1
        %s462 = smul.addr %s461, 128
        %s463 = scalar_lea.vmem [#allocation10], %s462
        %p464 = pneg %p196
        %p465 = pneg %p193
        %p466 = pneg %p224
        %p467 = pneg %p221
        %s468 = sand.u32 %s211, 1
        %s469 = scalar_lea.sflag [#allocation4], %s468
        %s470 = sand.u32 %s211, 1
        %s471 = smul.addr %s470, 128
        %s472 = scalar_lea.vmem [#allocation11], %s471
        %s473 = smul.u32 16, %s29
        %s474 = smul.u32 16, %s29
        %s475 = sadd.s32 %s29, 1
        %s476 = smul.u32 16, %s475
        %s477 = smul.u32 16, %s29
        %s478 = sadd.s32 %s29, 1
        %s479 = smul.u32 16, %s478
        %s480 = smul.u32 16, %s29
        %v481 = vld [vmem:[%s384] sm:$0xff]
        %v482 = vld [vmem:[%s384 + $0x8] sm:$0xff]
        %v483 = vld [vmem:[%s384 + $0x10] sm:$0xff]
        %v484 = vld [vmem:[%s384 + $0x18] sm:$0xff]
        %v485 = vld [vmem:[%s384 + $0x20] sm:$0xff]
        %v486 = vld [vmem:[%s384 + $0x28] sm:$0xff]
        %v487 = vld [vmem:[%s384 + $0x30] sm:$0xff]
        %v488 = vld [vmem:[%s384 + $0x38] sm:$0xff]
        %v489 = vld [vmem:[%s384 + $0x40] sm:$0xff]
        %v490 = vld [vmem:[%s384 + $0x48] sm:$0xff]
        %v491 = vld [vmem:[%s384 + $0x50] sm:$0xff]
        %v492 = vld [vmem:[%s384 + $0x58] sm:$0xff]
        %v493 = vld [vmem:[%s384 + $0x60] sm:$0xff]
        %v494 = vld [vmem:[%s384 + $0x68] sm:$0xff]
        %v495 = vld [vmem:[%s384 + $0x70] sm:$0xff]
        %v496 = vld [vmem:[%s384 + $0x78] sm:$0xff]
        %v497 = vmul.f32 %v481, 0.088388346
        %v498 = vmul.f32 %v482, 0.088388346
        %v499 = vmul.f32 %v483, 0.088388346
        %v500 = vmul.f32 %v484, 0.088388346
        %v501 = vmul.f32 %v485, 0.088388346
        %v502 = vmul.f32 %v486, 0.088388346
        %v503 = vmul.f32 %v487, 0.088388346
        %v504 = vmul.f32 %v488, 0.088388346
        %v505 = vmul.f32 %v489, 0.088388346
        %v506 = vmul.f32 %v490, 0.088388346
        %v507 = vmul.f32 %v491, 0.088388346
        %v508 = vmul.f32 %v492, 0.088388346
        %v509 = vmul.f32 %v493, 0.088388346
        %v510 = vmul.f32 %v494, 0.088388346
        %v511 = vmul.f32 %v495, 0.088388346
        %v512 = vmul.f32 %v496, 0.088388346
        %v513 = vld [vmem:[#allocation5] sm:$0xff]
        %v514 = vld [vmem:[#allocation5 + $0x8] sm:$0xff]
        %v515 = vld [vmem:[#allocation5 + $0x10] sm:$0xff]
        %v516 = vld [vmem:[#allocation5 + $0x18] sm:$0xff]
        %v517 = vld [vmem:[#allocation5 + $0x20] sm:$0xff]
        %v518 = vld [vmem:[#allocation5 + $0x28] sm:$0xff]
        %v519 = vld [vmem:[#allocation5 + $0x30] sm:$0xff]
        %v520 = vld [vmem:[#allocation5 + $0x38] sm:$0xff]
        %v521 = vld [vmem:[#allocation5 + $0x40] sm:$0xff]
        %v522 = vld [vmem:[#allocation5 + $0x48] sm:$0xff]
        %v523 = vld [vmem:[#allocation5 + $0x50] sm:$0xff]
        %v524 = vld [vmem:[#allocation5 + $0x58] sm:$0xff]
        %v525 = vld [vmem:[#allocation5 + $0x60] sm:$0xff]
        %v526 = vld [vmem:[#allocation5 + $0x68] sm:$0xff]
        %v527 = vld [vmem:[#allocation5 + $0x70] sm:$0xff]
        %v528 = vld [vmem:[#allocation5 + $0x78] sm:$0xff]
        %v529 = vld [vmem:[%s397] sm:$0xff]
        %v530 = vld [vmem:[%s397 + $0x8] sm:$0xff]
        %v531 = vld [vmem:[%s397 + $0x10] sm:$0xff]
        %v532 = vld [vmem:[%s397 + $0x18] sm:$0xff]
        %v533 = vld [vmem:[%s397 + $0x20] sm:$0xff]
        %v534 = vld [vmem:[%s397 + $0x28] sm:$0xff]
        %v535 = vld [vmem:[%s397 + $0x30] sm:$0xff]
        %v536 = vld [vmem:[%s397 + $0x38] sm:$0xff]
        %v537 = vld [vmem:[%s397 + $0x40] sm:$0xff]
        %v538 = vld [vmem:[%s397 + $0x48] sm:$0xff]
        %v539 = vld [vmem:[%s397 + $0x50] sm:$0xff]
        %v540 = vld [vmem:[%s397 + $0x58] sm:$0xff]
        %v541 = vld [vmem:[%s397 + $0x60] sm:$0xff]
        %v542 = vld [vmem:[%s397 + $0x68] sm:$0xff]
        %v543 = vld [vmem:[%s397 + $0x70] sm:$0xff]
        %v544 = vld [vmem:[%s397 + $0x78] sm:$0xff]
        %545 = vmatprep.subr.mxu0 0.0
        %546 = vmatpush1.xpose.msra.mxu0 %v529
        %547 = vmatprep.subr.mxu0 0.0
        %548 = vmatpush1.xpose.msra.mxu0 %v530
        %549 = vmatprep.subr.mxu0 0.0
        %550 = vmatpush1.xpose.msra.mxu0 %v531
        %551 = vmatprep.subr.mxu0 0.0
        %552 = vmatpush1.xpose.msra.mxu0 %v532
        %553 = vmatprep.subr.mxu0 0.0
        %554 = vmatpush1.xpose.msra.mxu0 %v533
        %555 = vmatprep.subr.mxu0 0.0
        %556 = vmatpush1.xpose.msra.mxu0 %v534
        %557 = vmatprep.subr.mxu0 0.0
        %558 = vmatpush1.xpose.msra.mxu0 %v535
        %559 = vmatprep.subr.mxu0 0.0
        %560 = vmatpush1.xpose.msra.mxu0 %v536
        %561 = vmatprep.subr.mxu0 0.0
        %562 = vmatpush1.xpose.msra.mxu0 %v537
        %563 = vmatprep.subr.mxu0 0.0
        %564 = vmatpush1.xpose.msra.mxu0 %v538
        %565 = vmatprep.subr.mxu0 0.0
        %566 = vmatpush1.xpose.msra.mxu0 %v539
        %567 = vmatprep.subr.mxu0 0.0
        %568 = vmatpush1.xpose.msra.mxu0 %v540
        %569 = vmatprep.subr.mxu0 0.0
        %570 = vmatpush1.xpose.msra.mxu0 %v541
        %571 = vmatprep.subr.mxu0 0.0
        %572 = vmatpush1.xpose.msra.mxu0 %v542
        %573 = vmatprep.subr.mxu0 0.0
        %574 = vmatpush1.xpose.msra.mxu0 %v543
        %575 = vmatprep.subr.mxu0 0.0
        %576 = vmatpush1.xpose.msra.mxu0 %v544
        %577 = vmatprep.subr.mxu0 0.0
        %578 = vmatpush1.xpose.msra.mxu0 0.0
        %579 = vmatprep.subr.mxu0 0.0
        %580 = vmatpush1.xpose.msra.mxu0 0.0
        %581 = vmatprep.subr.mxu0 0.0
        %582 = vmatpush1.xpose.msra.mxu0 0.0
        %583 = vmatprep.subr.mxu0 0.0
        %584 = vmatpush1.xpose.msra.mxu0 0.0
        %585 = vmatprep.subr.mxu0 0.0
        %586 = vmatpush1.xpose.msra.mxu0 0.0
        %587 = vmatprep.subr.mxu0 0.0
        %588 = vmatpush1.xpose.msra.mxu0 0.0
        %589 = vmatprep.subr.mxu0 0.0
        %590 = vmatpush1.xpose.msra.mxu0 0.0
        %591 = vmatprep.subr.mxu0 0.0
        %592 = vmatpush1.xpose.msra.mxu0 0.0
        %593 = vmatprep.subr.mxu0 0.0
        %594 = vmatpush1.xpose.msra.mxu0 0.0
        %595 = vmatprep.subr.mxu0 0.0
        %596 = vmatpush1.xpose.msra.mxu0 0.0
        %597 = vmatprep.subr.mxu0 0.0
        %598 = vmatpush1.xpose.msra.mxu0 0.0
        %599 = vmatprep.subr.mxu0 0.0
        %600 = vmatpush1.xpose.msra.mxu0 0.0
        %601 = vmatprep.subr.mxu0 0.0
        %602 = vmatpush1.xpose.msra.mxu0 0.0
        %603 = vmatprep.subr.mxu0 0.0
        %604 = vmatpush1.xpose.msra.mxu0 0.0
        %605 = vmatprep.subr.mxu0 0.0
        %606 = vmatpush1.xpose.msra.mxu0 0.0
        %607 = vmatprep.subr.mxu0 0.0
        %608 = vmatpush1.xpose.msra.mxu0 0.0
        %609 = vmatprep.mubr.f32.mxu0 0.0
        %610 = vmatmul.mubr.f32.gmra.mrb[0].mxu0 %v497
        %v611 = vpop.f32.mrb[0].mxu0
        %v612 = vadd.f32 0.0, %v611
        %v613 = vpop.f32.mrb[0].mxu0
        %614 = vmatprep.mubr.f32.mxu0 0.0
        %615 = vmatmul.mubr.f32.gmra.mrb[0].mxu0 %v498
        %v616 = vpop.f32.mrb[0].mxu0
        %v617 = vadd.f32 0.0, %v616
        %v618 = vpop.f32.mrb[0].mxu0
        %619 = vmatprep.mubr.f32.mxu0 0.0
        %620 = vmatmul.mubr.f32.gmra.mrb[0].mxu0 %v499
        %v621 = vpop.f32.mrb[0].mxu0
        %v622 = vadd.f32 0.0, %v621
        %v623 = vpop.f32.mrb[0].mxu0
        %624 = vmatprep.mubr.f32.mxu0 0.0
        %625 = vmatmul.mubr.f32.gmra.mrb[0].mxu0 %v500
        %v626 = vpop.f32.mrb[0].mxu0
        %v627 = vadd.f32 0.0, %v626
        %v628 = vpop.f32.mrb[0].mxu0
        %629 = vmatprep.mubr.f32.mxu0 0.0
        %630 = vmatmul.mubr.f32.gmra.mrb[0].mxu0 %v501
        %v631 = vpop.f32.mrb[0].mxu0
        %v632 = vadd.f32 0.0, %v631
        %v633 = vpop.f32.mrb[0].mxu0
        %634 = vmatprep.mubr.f32.mxu0 0.0
        %635 = vmatmul.mubr.f32.gmra.mrb[0].mxu0 %v502
        %v636 = vpop.f32.mrb[0].mxu0
        %v637 = vadd.f32 0.0, %v636
        %v638 = vpop.f32.mrb[0].mxu0
        %639 = vmatprep.mubr.f32.mxu0 0.0
        %640 = vmatmul.mubr.f32.gmra.mrb[0].mxu0 %v503
        %v641 = vpop.f32.mrb[0].mxu0
        %v642 = vadd.f32 0.0, %v641
        %v643 = vpop.f32.mrb[0].mxu0
        %644 = vmatprep.mubr.f32.mxu0 0.0
        %645 = vmatmul.mubr.f32.gmra.mrb[0].mxu0 %v504
        %v646 = vpop.f32.mrb[0].mxu0
        %v647 = vadd.f32 0.0, %v646
        %v648 = vpop.f32.mrb[0].mxu0
        %649 = vmatprep.mubr.f32.mxu0 0.0
        %650 = vmatmul.mubr.f32.gmra.mrb[0].mxu0 %v505
        %v651 = vpop.f32.mrb[0].mxu0
        %v652 = vadd.f32 0.0, %v651
        %v653 = vpop.f32.mrb[0].mxu0
        %654 = vmatprep.mubr.f32.mxu0 0.0
        %655 = vmatmul.mubr.f32.gmra.mrb[0].mxu0 %v506
        %v656 = vpop.f32.mrb[0].mxu0
        %v657 = vadd.f32 0.0, %v656
        %v658 = vpop.f32.mrb[0].mxu0
        %659 = vmatprep.mubr.f32.mxu0 0.0
        %660 = vmatmul.mubr.f32.gmra.mrb[0].mxu0 %v507
        %v661 = vpop.f32.mrb[0].mxu0
        %v662 = vadd.f32 0.0, %v661
        %v663 = vpop.f32.mrb[0].mxu0
        %664 = vmatprep.mubr.f32.mxu0 0.0
        %665 = vmatmul.mubr.f32.gmra.mrb[0].mxu0 %v508
        %v666 = vpop.f32.mrb[0].mxu0
        %v667 = vadd.f32 0.0, %v666
        %v668 = vpop.f32.mrb[0].mxu0
        %669 = vmatprep.mubr.f32.mxu0 0.0
        %670 = vmatmul.mubr.f32.gmra.mrb[0].mxu0 %v509
        %v671 = vpop.f32.mrb[0].mxu0
        %v672 = vadd.f32 0.0, %v671
        %v673 = vpop.f32.mrb[0].mxu0
        %674 = vmatprep.mubr.f32.mxu0 0.0
        %675 = vmatmul.mubr.f32.gmra.mrb[0].mxu0 %v510
        %v676 = vpop.f32.mrb[0].mxu0
        %v677 = vadd.f32 0.0, %v676
        %v678 = vpop.f32.mrb[0].mxu0
        %679 = vmatprep.mubr.f32.mxu0 0.0
        %680 = vmatmul.mubr.f32.gmra.mrb[0].mxu0 %v511
        %v681 = vpop.f32.mrb[0].mxu0
        %v682 = vadd.f32 0.0, %v681
        %v683 = vpop.f32.mrb[0].mxu0
        %684 = vmatprep.mubr.f32.mxu0 0.0
        %685 = vmatmul.mubr.f32.gmra.mrb[0].mxu0 %v512
        %v686 = vpop.f32.mrb[0].mxu0
        %v687 = vadd.f32 0.0, %v686
        %v688 = vpop.f32.mrb[0].mxu0
        %689 = vdwg.mxu0
        %v690 = vld [vmem:[%s406] sm:$0xff]
        %v691 = vld [vmem:[%s406 + $0x8] sm:$0xff]
        %v692 = vld [vmem:[%s406 + $0x10] sm:$0xff]
        %v693 = vld [vmem:[%s406 + $0x18] sm:$0xff]
        %v694 = vld [vmem:[%s406 + $0x20] sm:$0xff]
        %v695 = vld [vmem:[%s406 + $0x28] sm:$0xff]
        %v696 = vld [vmem:[%s406 + $0x30] sm:$0xff]
        %v697 = vld [vmem:[%s406 + $0x38] sm:$0xff]
        %v698 = vld [vmem:[%s406 + $0x40] sm:$0xff]
        %v699 = vld [vmem:[%s406 + $0x48] sm:$0xff]
        %v700 = vld [vmem:[%s406 + $0x50] sm:$0xff]
        %v701 = vld [vmem:[%s406 + $0x58] sm:$0xff]
        %v702 = vld [vmem:[%s406 + $0x60] sm:$0xff]
        %v703 = vld [vmem:[%s406 + $0x68] sm:$0xff]
        %v704 = vld [vmem:[%s406 + $0x70] sm:$0xff]
        %v705 = vld [vmem:[%s406 + $0x78] sm:$0xff]
        %706 = vmatprep.subr.mxu0 0.0
        %707 = vmatpush1.xpose.msra.mxu0 %v690
        %708 = vmatprep.subr.mxu0 0.0
        %709 = vmatpush1.xpose.msra.mxu0 %v691
        %710 = vmatprep.subr.mxu0 0.0
        %711 = vmatpush1.xpose.msra.mxu0 %v692
        %712 = vmatprep.subr.mxu0 0.0
        %713 = vmatpush1.xpose.msra.mxu0 %v693
        %714 = vmatprep.subr.mxu0 0.0
        %715 = vmatpush1.xpose.msra.mxu0 %v694
        %716 = vmatprep.subr.mxu0 0.0
        %717 = vmatpush1.xpose.msra.mxu0 %v695
        %718 = vmatprep.subr.mxu0 0.0
        %719 = vmatpush1.xpose.msra.mxu0 %v696
        %720 = vmatprep.subr.mxu0 0.0
        %721 = vmatpush1.xpose.msra.mxu0 %v697
        %722 = vmatprep.subr.mxu0 0.0
        %723 = vmatpush1.xpose.msra.mxu0 %v698
        %724 = vmatprep.subr.mxu0 0.0
        %725 = vmatpush1.xpose.msra.mxu0 %v699
        %726 = vmatprep.subr.mxu0 0.0
        %727 = vmatpush1.xpose.msra.mxu0 %v700
        %728 = vmatprep.subr.mxu0 0.0
        %729 = vmatpush1.xpose.msra.mxu0 %v701
        %730 = vmatprep.subr.mxu0 0.0
        %731 = vmatpush1.xpose.msra.mxu0 %v702
        %732 = vmatprep.subr.mxu0 0.0
        %733 = vmatpush1.xpose.msra.mxu0 %v703
        %734 = vmatprep.subr.mxu0 0.0
        %735 = vmatpush1.xpose.msra.mxu0 %v704
        %736 = vmatprep.subr.mxu0 0.0
        %737 = vmatpush1.xpose.msra.mxu0 %v705
        %738 = vmatprep.subr.mxu0 0.0
        %739 = vmatpush1.xpose.msra.mxu0 0.0
        %740 = vmatprep.subr.mxu0 0.0
        %741 = vmatpush1.xpose.msra.mxu0 0.0
        %742 = vmatprep.subr.mxu0 0.0
        %743 = vmatpush1.xpose.msra.mxu0 0.0
        %744 = vmatprep.subr.mxu0 0.0
        %745 = vmatpush1.xpose.msra.mxu0 0.0
        %746 = vmatprep.subr.mxu0 0.0
        %747 = vmatpush1.xpose.msra.mxu0 0.0
        %748 = vmatprep.subr.mxu0 0.0
        %749 = vmatpush1.xpose.msra.mxu0 0.0
        %750 = vmatprep.subr.mxu0 0.0
        %751 = vmatpush1.xpose.msra.mxu0 0.0
        %752 = vmatprep.subr.mxu0 0.0
        %753 = vmatpush1.xpose.msra.mxu0 0.0
        %754 = vmatprep.subr.mxu0 0.0
        %755 = vmatpush1.xpose.msra.mxu0 0.0
        %756 = vmatprep.subr.mxu0 0.0
        %757 = vmatpush1.xpose.msra.mxu0 0.0
        %758 = vmatprep.subr.mxu0 0.0
        %759 = vmatpush1.xpose.msra.mxu0 0.0
        %760 = vmatprep.subr.mxu0 0.0
        %761 = vmatpush1.xpose.msra.mxu0 0.0
        %762 = vmatprep.subr.mxu0 0.0
        %763 = vmatpush1.xpose.msra.mxu0 0.0
        %764 = vmatprep.subr.mxu0 0.0
        %765 = vmatpush1.xpose.msra.mxu0 0.0
        %766 = vmatprep.subr.mxu0 0.0
        %767 = vmatpush1.xpose.msra.mxu0 0.0
        %768 = vmatprep.subr.mxu0 0.0
        %769 = vmatpush1.xpose.msra.mxu0 0.0
        %770 = vmatprep.mubr.f32.mxu0 0.0
        %771 = vmatmul.mubr.f32.gmra.mrb[0].mxu0 %v497
        %v772 = vpop.f32.mrb[0].mxu0
        %v773 = vadd.f32 0.0, %v772
        %v774 = vpop.f32.mrb[0].mxu0
        %775 = vmatprep.mubr.f32.mxu0 0.0
        %776 = vmatmul.mubr.f32.gmra.mrb[0].mxu0 %v498
        %v777 = vpop.f32.mrb[0].mxu0
        %v778 = vadd.f32 0.0, %v777
        %v779 = vpop.f32.mrb[0].mxu0
        %780 = vmatprep.mubr.f32.mxu0 0.0
        %781 = vmatmul.mubr.f32.gmra.mrb[0].mxu0 %v499
        %v782 = vpop.f32.mrb[0].mxu0
        %v783 = vadd.f32 0.0, %v782
        %v784 = vpop.f32.mrb[0].mxu0
        %785 = vmatprep.mubr.f32.mxu0 0.0
        %786 = vmatmul.mubr.f32.gmra.mrb[0].mxu0 %v500
        %v787 = vpop.f32.mrb[0].mxu0
        %v788 = vadd.f32 0.0, %v787
        %v789 = vpop.f32.mrb[0].mxu0
        %790 = vmatprep.mubr.f32.mxu0 0.0
        %791 = vmatmul.mubr.f32.gmra.mrb[0].mxu0 %v501
        %v792 = vpop.f32.mrb[0].mxu0
        %v793 = vadd.f32 0.0, %v792
        %v794 = vpop.f32.mrb[0].mxu0
        %795 = vmatprep.mubr.f32.mxu0 0.0
        %796 = vmatmul.mubr.f32.gmra.mrb[0].mxu0 %v502
        %v797 = vpop.f32.mrb[0].mxu0
        %v798 = vadd.f32 0.0, %v797
        %v799 = vpop.f32.mrb[0].mxu0
        %800 = vmatprep.mubr.f32.mxu0 0.0
        %801 = vmatmul.mubr.f32.gmra.mrb[0].mxu0 %v503
        %v802 = vpop.f32.mrb[0].mxu0
        %v803 = vadd.f32 0.0, %v802
        %v804 = vpop.f32.mrb[0].mxu0
        %805 = vmatprep.mubr.f32.mxu0 0.0
        %806 = vmatmul.mubr.f32.gmra.mrb[0].mxu0 %v504
        %v807 = vpop.f32.mrb[0].mxu0
        %v808 = vadd.f32 0.0, %v807
        %v809 = vpop.f32.mrb[0].mxu0
        %810 = vmatprep.mubr.f32.mxu0 0.0
        %811 = vmatmul.mubr.f32.gmra.mrb[0].mxu0 %v505
        %v812 = vpop.f32.mrb[0].mxu0
        %v813 = vadd.f32 0.0, %v812
        %v814 = vpop.f32.mrb[0].mxu0
        %815 = vmatprep.mubr.f32.mxu0 0.0
        %816 = vmatmul.mubr.f32.gmra.mrb[0].mxu0 %v506
        %v817 = vpop.f32.mrb[0].mxu0
        %v818 = vadd.f32 0.0, %v817
        %v819 = vpop.f32.mrb[0].mxu0
        %820 = vmatprep.mubr.f32.mxu0 0.0
        %821 = vmatmul.mubr.f32.gmra.mrb[0].mxu0 %v507
        %v822 = vpop.f32.mrb[0].mxu0
        %v823 = vadd.f32 0.0, %v822
        %v824 = vpop.f32.mrb[0].mxu0
        %825 = vmatprep.mubr.f32.mxu0 0.0
        %826 = vmatmul.mubr.f32.gmra.mrb[0].mxu0 %v508
        %v827 = vpop.f32.mrb[0].mxu0
        %v828 = vadd.f32 0.0, %v827
        %v829 = vpop.f32.mrb[0].mxu0
        %830 = vmatprep.mubr.f32.mxu0 0.0
        %831 = vmatmul.mubr.f32.gmra.mrb[0].mxu0 %v509
        %v832 = vpop.f32.mrb[0].mxu0
        %v833 = vadd.f32 0.0, %v832
        %v834 = vpop.f32.mrb[0].mxu0
        %835 = vmatprep.mubr.f32.mxu0 0.0
        %836 = vmatmul.mubr.f32.gmra.mrb[0].mxu0 %v510
        %v837 = vpop.f32.mrb[0].mxu0
        %v838 = vadd.f32 0.0, %v837
        %v839 = vpop.f32.mrb[0].mxu0
        %840 = vmatprep.mubr.f32.mxu0 0.0
        %841 = vmatmul.mubr.f32.gmra.mrb[0].mxu0 %v511
        %v842 = vpop.f32.mrb[0].mxu0
        %v843 = vadd.f32 0.0, %v842
        %v844 = vpop.f32.mrb[0].mxu0
        %845 = vmatprep.mubr.f32.mxu0 0.0
        %846 = vmatmul.mubr.f32.gmra.mrb[0].mxu0 %v512
        %v847 = vpop.f32.mrb[0].mxu0
        %v848 = vadd.f32 0.0, %v847
        %v849 = vpop.f32.mrb[0].mxu0
        %850 = vdwg.mxu0
        %851 = vmatprep.subr.mxu0 0.0
        %852 = vmatpush1.msra.mxu0 %v513
        %853 = vmatprep.subr.mxu0 0.0
        %854 = vmatpush1.msra.mxu0 %v514
        %855 = vmatprep.subr.mxu0 0.0
        %856 = vmatpush1.msra.mxu0 %v515
        %857 = vmatprep.subr.mxu0 0.0
        %858 = vmatpush1.msra.mxu0 %v516
        %859 = vmatprep.subr.mxu0 0.0
        %860 = vmatpush1.msra.mxu0 %v517
        %861 = vmatprep.subr.mxu0 0.0
        %862 = vmatpush1.msra.mxu0 %v518
        %863 = vmatprep.subr.mxu0 0.0
        %864 = vmatpush1.msra.mxu0 %v519
        %865 = vmatprep.subr.mxu0 0.0
        %866 = vmatpush1.msra.mxu0 %v520
        %867 = vmatprep.subr.mxu0 0.0
        %868 = vmatpush1.msra.mxu0 %v521
        %869 = vmatprep.subr.mxu0 0.0
        %870 = vmatpush1.msra.mxu0 %v522
        %871 = vmatprep.subr.mxu0 0.0
        %872 = vmatpush1.msra.mxu0 %v523
        %873 = vmatprep.subr.mxu0 0.0
        %874 = vmatpush1.msra.mxu0 %v524
        %875 = vmatprep.subr.mxu0 0.0
        %876 = vmatpush1.msra.mxu0 %v525
        %877 = vmatprep.subr.mxu0 0.0
        %878 = vmatpush1.msra.mxu0 %v526
        %879 = vmatprep.subr.mxu0 0.0
        %880 = vmatpush1.msra.mxu0 %v527
        %881 = vmatprep.subr.mxu0 0.0
        %882 = vmatpush1.msra.mxu0 %v528
        %883 = vmatprep.subr.mxu0 0.0
        %884 = vmatpush1.msra.mxu0 0.0
        %885 = vmatprep.subr.mxu0 0.0
        %886 = vmatpush1.msra.mxu0 0.0
        %887 = vmatprep.subr.mxu0 0.0
        %888 = vmatpush1.msra.mxu0 0.0
        %889 = vmatprep.subr.mxu0 0.0
        %890 = vmatpush1.msra.mxu0 0.0
        %891 = vmatprep.subr.mxu0 0.0
        %892 = vmatpush1.msra.mxu0 0.0
        %893 = vmatprep.subr.mxu0 0.0
        %894 = vmatpush1.msra.mxu0 0.0
        %895 = vmatprep.subr.mxu0 0.0
        %896 = vmatpush1.msra.mxu0 0.0
        %897 = vmatprep.subr.mxu0 0.0
        %898 = vmatpush1.msra.mxu0 0.0
        %899 = vmatprep.subr.mxu0 0.0
        %900 = vmatpush1.msra.mxu0 0.0
        %901 = vmatprep.subr.mxu0 0.0
        %902 = vmatpush1.msra.mxu0 0.0
        %903 = vmatprep.subr.mxu0 0.0
        %904 = vmatpush1.msra.mxu0 0.0
        %905 = vmatprep.subr.mxu0 0.0
        %906 = vmatpush1.msra.mxu0 0.0
        %907 = vmatprep.subr.mxu0 0.0
        %908 = vmatpush1.msra.mxu0 0.0
        %909 = vmatprep.subr.mxu0 0.0
        %910 = vmatpush1.msra.mxu0 0.0
        %911 = vmatprep.subr.mxu0 0.0
        %912 = vmatpush1.msra.mxu0 0.0
        %913 = vmatprep.subr.mxu0 0.0
        %914 = vmatpush1.msra.mxu0 0.0
        %915 = vmatprep.mubr.f32.mxu0 0.0
        %916 = vmatmul.mubr.f32.gmra.mrb[0].mxu0 %v497
        %v917 = vpop.f32.mrb[0].mxu0
        %v918 = vadd.f32 0.0, %v917
        %v919 = vpop.f32.mrb[0].mxu0
        %920 = vmatprep.mubr.f32.mxu0 0.0
        %921 = vmatmul.mubr.f32.gmra.mrb[0].mxu0 %v498
        %v922 = vpop.f32.mrb[0].mxu0
        %v923 = vadd.f32 0.0, %v922
        %v924 = vpop.f32.mrb[0].mxu0
        %925 = vmatprep.mubr.f32.mxu0 0.0
        %926 = vmatmul.mubr.f32.gmra.mrb[0].mxu0 %v499
        %v927 = vpop.f32.mrb[0].mxu0
        %v928 = vadd.f32 0.0, %v927
        %v929 = vpop.f32.mrb[0].mxu0
        %930 = vmatprep.mubr.f32.mxu0 0.0
        %931 = vmatmul.mubr.f32.gmra.mrb[0].mxu0 %v500
        %v932 = vpop.f32.mrb[0].mxu0
        %v933 = vadd.f32 0.0, %v932
        %v934 = vpop.f32.mrb[0].mxu0
        %935 = vmatprep.mubr.f32.mxu0 0.0
        %936 = vmatmul.mubr.f32.gmra.mrb[0].mxu0 %v501
        %v937 = vpop.f32.mrb[0].mxu0
        %v938 = vadd.f32 0.0, %v937
        %v939 = vpop.f32.mrb[0].mxu0
        %940 = vmatprep.mubr.f32.mxu0 0.0
        %941 = vmatmul.mubr.f32.gmra.mrb[0].mxu0 %v502
        %v942 = vpop.f32.mrb[0].mxu0
        %v943 = vadd.f32 0.0, %v942
        %v944 = vpop.f32.mrb[0].mxu0
        %945 = vmatprep.mubr.f32.mxu0 0.0
        %946 = vmatmul.mubr.f32.gmra.mrb[0].mxu0 %v503
        %v947 = vpop.f32.mrb[0].mxu0
        %v948 = vadd.f32 0.0, %v947
        %v949 = vpop.f32.mrb[0].mxu0
        %950 = vmatprep.mubr.f32.mxu0 0.0
        %951 = vmatmul.mubr.f32.gmra.mrb[0].mxu0 %v504
        %v952 = vpop.f32.mrb[0].mxu0
        %v953 = vadd.f32 0.0, %v952
        %v954 = vpop.f32.mrb[0].mxu0
        %955 = vmatprep.mubr.f32.mxu0 0.0
        %956 = vmatmul.mubr.f32.gmra.mrb[0].mxu0 %v505
        %v957 = vpop.f32.mrb[0].mxu0
        %v958 = vadd.f32 0.0, %v957
        %v959 = vpop.f32.mrb[0].mxu0
        %960 = vmatprep.mubr.f32.mxu0 0.0
        %961 = vmatmul.mubr.f32.gmra.mrb[0].mxu0 %v506
        %v962 = vpop.f32.mrb[0].mxu0
        %v963 = vadd.f32 0.0, %v962
        %v964 = vpop.f32.mrb[0].mxu0
        %965 = vmatprep.mubr.f32.mxu0 0.0
        %966 = vmatmul.mubr.f32.gmra.mrb[0].mxu0 %v507
        %v967 = vpop.f32.mrb[0].mxu0
        %v968 = vadd.f32 0.0, %v967
        %v969 = vpop.f32.mrb[0].mxu0
        %970 = vmatprep.mubr.f32.mxu0 0.0
        %971 = vmatmul.mubr.f32.gmra.mrb[0].mxu0 %v508
        %v972 = vpop.f32.mrb[0].mxu0
        %v973 = vadd.f32 0.0, %v972
        %v974 = vpop.f32.mrb[0].mxu0
        %975 = vmatprep.mubr.f32.mxu0 0.0
        %976 = vmatmul.mubr.f32.gmra.mrb[0].mxu0 %v509
        %v977 = vpop.f32.mrb[0].mxu0
        %v978 = vadd.f32 0.0, %v977
        %v979 = vpop.f32.mrb[0].mxu0
        %980 = vmatprep.mubr.f32.mxu0 0.0
        %981 = vmatmul.mubr.f32.gmra.mrb[0].mxu0 %v510
        %v982 = vpop.f32.mrb[0].mxu0
        %v983 = vadd.f32 0.0, %v982
        %v984 = vpop.f32.mrb[0].mxu0
        %985 = vmatprep.mubr.f32.mxu0 0.0
        %986 = vmatmul.mubr.f32.gmra.mrb[0].mxu0 %v511
        %v987 = vpop.f32.mrb[0].mxu0
        %v988 = vadd.f32 0.0, %v987
        %v989 = vpop.f32.mrb[0].mxu0
        %990 = vmatprep.mubr.f32.mxu0 0.0
        %991 = vmatmul.mubr.f32.gmra.mrb[0].mxu0 %v512
        %v992 = vpop.f32.mrb[0].mxu0
        %v993 = vadd.f32 0.0, %v992
        %v994 = vpop.f32.mrb[0].mxu0
        %995 = vdwg.mxu0
        %v996 = vlaneseq
        %v997 = vshrl.u32 %v996, 7
        %v998 = vadd.s32 %v997, 8
        %v999 = vadd.s32 %v997, 16
        %v1000 = vadd.s32 %v997, 24
        %v1001 = vadd.s32 %v997, 32
        %v1002 = vadd.s32 %v997, 40
        %v1003 = vadd.s32 %v997, 48
        %v1004 = vadd.s32 %v997, 56
        %v1005 = vadd.s32 %v997, 64
        %v1006 = vadd.s32 %v997, 72
        %v1007 = vadd.s32 %v997, 80
        %v1008 = vadd.s32 %v997, 88
        %v1009 = vadd.s32 %v997, 96
        %v1010 = vadd.s32 %v997, 104
        %v1011 = vadd.s32 %v997, 112
        %v1012 = vadd.s32 %v997, 120
        %v1013 = vlaneseq
        %v1014 = vand.u32 %v1013, 127
        %v1015 = vadd.s32 %v1014, 128
        %v1016 = vsub.s32 %v1014, %v997
        %v1017 = vsub.s32 %v1015, %v997
        %v1018 = vsub.s32 %v1014, %v998
        %v1019 = vsub.s32 %v1015, %v998
        %v1020 = vsub.s32 %v1014, %v999
        %v1021 = vsub.s32 %v1015, %v999
        %v1022 = vsub.s32 %v1014, %v1000
        %v1023 = vsub.s32 %v1015, %v1000
        %v1024 = vsub.s32 %v1014, %v1001
        %v1025 = vsub.s32 %v1015, %v1001
        %v1026 = vsub.s32 %v1014, %v1002
        %v1027 = vsub.s32 %v1015, %v1002
        %v1028 = vsub.s32 %v1014, %v1003
        %v1029 = vsub.s32 %v1015, %v1003
        %v1030 = vsub.s32 %v1014, %v1004
        %v1031 = vsub.s32 %v1015, %v1004
        %v1032 = vsub.s32 %v1014, %v1005
        %v1033 = vsub.s32 %v1015, %v1005
        %v1034 = vsub.s32 %v1014, %v1006
        %v1035 = vsub.s32 %v1015, %v1006
        %v1036 = vsub.s32 %v1014, %v1007
        %v1037 = vsub.s32 %v1015, %v1007
        %v1038 = vsub.s32 %v1014, %v1008
        %v1039 = vsub.s32 %v1015, %v1008
        %v1040 = vsub.s32 %v1014, %v1009
        %v1041 = vsub.s32 %v1015, %v1009
        %v1042 = vsub.s32 %v1014, %v1010
        %v1043 = vsub.s32 %v1015, %v1010
        %v1044 = vsub.s32 %v1014, %v1011
        %v1045 = vsub.s32 %v1015, %v1011
        %v1046 = vsub.s32 %v1014, %v1012
        %v1047 = vsub.s32 %v1015, %v1012
        %vm1048 = vcmp.ge.s32.totalorder %v1016, 0
        %vm1049 = vcmp.ge.s32.totalorder %v1017, 0
        %vm1050 = vcmp.ge.s32.totalorder %v1018, 0
        %vm1051 = vcmp.ge.s32.totalorder %v1019, 0
        %vm1052 = vcmp.ge.s32.totalorder %v1020, 0
        %vm1053 = vcmp.ge.s32.totalorder %v1021, 0
        %vm1054 = vcmp.ge.s32.totalorder %v1022, 0
        %vm1055 = vcmp.ge.s32.totalorder %v1023, 0
        %vm1056 = vcmp.ge.s32.totalorder %v1024, 0
        %vm1057 = vcmp.ge.s32.totalorder %v1025, 0
        %vm1058 = vcmp.ge.s32.totalorder %v1026, 0
        %vm1059 = vcmp.ge.s32.totalorder %v1027, 0
        %vm1060 = vcmp.ge.s32.totalorder %v1028, 0
        %vm1061 = vcmp.ge.s32.totalorder %v1029, 0
        %vm1062 = vcmp.ge.s32.totalorder %v1030, 0
        %vm1063 = vcmp.ge.s32.totalorder %v1031, 0
        %vm1064 = vcmp.ge.s32.totalorder %v1032, 0
        %vm1065 = vcmp.ge.s32.totalorder %v1033, 0
        %vm1066 = vcmp.ge.s32.totalorder %v1034, 0
        %vm1067 = vcmp.ge.s32.totalorder %v1035, 0
        %vm1068 = vcmp.ge.s32.totalorder %v1036, 0
        %vm1069 = vcmp.ge.s32.totalorder %v1037, 0
        %vm1070 = vcmp.ge.s32.totalorder %v1038, 0
        %vm1071 = vcmp.ge.s32.totalorder %v1039, 0
        %vm1072 = vcmp.ge.s32.totalorder %v1040, 0
        %vm1073 = vcmp.ge.s32.totalorder %v1041, 0
        %vm1074 = vcmp.ge.s32.totalorder %v1042, 0
        %vm1075 = vcmp.ge.s32.totalorder %v1043, 0
        %vm1076 = vcmp.ge.s32.totalorder %v1044, 0
        %vm1077 = vcmp.ge.s32.totalorder %v1045, 0
        %vm1078 = vcmp.ge.s32.totalorder %v1046, 0
        %vm1079 = vcmp.ge.s32.totalorder %v1047, 0
        %vm1080 = vcmp.lt.s32.totalorder %v1016, 128
        %vm1081 = vcmp.lt.s32.totalorder %v1017, 128
        %vm1082 = vcmp.lt.s32.totalorder %v1018, 128
        %vm1083 = vcmp.lt.s32.totalorder %v1019, 128
        %vm1084 = vcmp.lt.s32.totalorder %v1020, 128
        %vm1085 = vcmp.lt.s32.totalorder %v1021, 128
        %vm1086 = vcmp.lt.s32.totalorder %v1022, 128
        %vm1087 = vcmp.lt.s32.totalorder %v1023, 128
        %vm1088 = vcmp.lt.s32.totalorder %v1024, 128
        %vm1089 = vcmp.lt.s32.totalorder %v1025, 128
        %vm1090 = vcmp.lt.s32.totalorder %v1026, 128
        %vm1091 = vcmp.lt.s32.totalorder %v1027, 128
        %vm1092 = vcmp.lt.s32.totalorder %v1028, 128
        %vm1093 = vcmp.lt.s32.totalorder %v1029, 128
        %vm1094 = vcmp.lt.s32.totalorder %v1030, 128
        %vm1095 = vcmp.lt.s32.totalorder %v1031, 128
        %vm1096 = vcmp.lt.s32.totalorder %v1032, 128
        %vm1097 = vcmp.lt.s32.totalorder %v1033, 128
        %vm1098 = vcmp.lt.s32.totalorder %v1034, 128
        %vm1099 = vcmp.lt.s32.totalorder %v1035, 128
        %vm1100 = vcmp.lt.s32.totalorder %v1036, 128
        %vm1101 = vcmp.lt.s32.totalorder %v1037, 128
        %vm1102 = vcmp.lt.s32.totalorder %v1038, 128
        %vm1103 = vcmp.lt.s32.totalorder %v1039, 128
        %vm1104 = vcmp.lt.s32.totalorder %v1040, 128
        %vm1105 = vcmp.lt.s32.totalorder %v1041, 128
        %vm1106 = vcmp.lt.s32.totalorder %v1042, 128
        %vm1107 = vcmp.lt.s32.totalorder %v1043, 128
        %vm1108 = vcmp.lt.s32.totalorder %v1044, 128
        %vm1109 = vcmp.lt.s32.totalorder %v1045, 128
        %vm1110 = vcmp.lt.s32.totalorder %v1046, 128
        %vm1111 = vcmp.lt.s32.totalorder %v1047, 128
        %vm1112 = vmand %vm1048, %vm1080
        %vm1113 = vmand %vm1049, %vm1081
        %vm1114 = vmand %vm1050, %vm1082
        %vm1115 = vmand %vm1051, %vm1083
        %vm1116 = vmand %vm1052, %vm1084
        %vm1117 = vmand %vm1053, %vm1085
        %vm1118 = vmand %vm1054, %vm1086
        %vm1119 = vmand %vm1055, %vm1087
        %vm1120 = vmand %vm1056, %vm1088
        %vm1121 = vmand %vm1057, %vm1089
        %vm1122 = vmand %vm1058, %vm1090
        %vm1123 = vmand %vm1059, %vm1091
        %vm1124 = vmand %vm1060, %vm1092
        %vm1125 = vmand %vm1061, %vm1093
        %vm1126 = vmand %vm1062, %vm1094
        %vm1127 = vmand %vm1063, %vm1095
        %vm1128 = vmand %vm1064, %vm1096
        %vm1129 = vmand %vm1065, %vm1097
        %vm1130 = vmand %vm1066, %vm1098
        %vm1131 = vmand %vm1067, %vm1099
        %vm1132 = vmand %vm1068, %vm1100
        %vm1133 = vmand %vm1069, %vm1101
        %vm1134 = vmand %vm1070, %vm1102
        %vm1135 = vmand %vm1071, %vm1103
        %vm1136 = vmand %vm1072, %vm1104
        %vm1137 = vmand %vm1073, %vm1105
        %vm1138 = vmand %vm1074, %vm1106
        %vm1139 = vmand %vm1075, %vm1107
        %vm1140 = vmand %vm1076, %vm1108
        %vm1141 = vmand %vm1077, %vm1109
        %vm1142 = vmand %vm1078, %vm1110
        %vm1143 = vmand %vm1079, %vm1111
        %1145 = vrot.lane.b32.xlu0 %v918, 256
        %v1146 = vpop.permute.xlu0 %1145
        %1148 = vrot.lane.b32.xlu0 0.0, 256
        %v1149 = vpop.permute.xlu0 %1148
        %vm1150 = vcmp.lt.s32.totalorder %v1014, %v997
        %v1151 = vsel %vm1150, %v1146, %v1149
        %v1152 = vsel %vm1150, %v1149, %v1146
        %s1154 = sor.u32 256, 8
        %1155 = vrot.lane.b32.xlu0 %v923, %s1154
        %v1156 = vpop.permute.xlu0 %1155
        %s1158 = sor.u32 256, 8
        %1159 = vrot.lane.b32.xlu0 0.0, %s1158
        %v1160 = vpop.permute.xlu0 %1159
        %vm1161 = vcmp.lt.s32.totalorder %v1014, %v998
        %v1162 = vsel %vm1161, %v1156, %v1160
        %v1163 = vsel %vm1161, %v1160, %v1156
        %s1165 = sor.u32 256, 16
        %1166 = vrot.lane.b32.xlu0 %v928, %s1165
        %v1167 = vpop.permute.xlu0 %1166
        %s1169 = sor.u32 256, 16
        %1170 = vrot.lane.b32.xlu0 0.0, %s1169
        %v1171 = vpop.permute.xlu0 %1170
        %vm1172 = vcmp.lt.s32.totalorder %v1014, %v999
        %v1173 = vsel %vm1172, %v1167, %v1171
        %v1174 = vsel %vm1172, %v1171, %v1167
        %s1176 = sor.u32 256, 24
        %1177 = vrot.lane.b32.xlu0 %v933, %s1176
        %v1178 = vpop.permute.xlu0 %1177
        %s1180 = sor.u32 256, 24
        %1181 = vrot.lane.b32.xlu0 0.0, %s1180
        %v1182 = vpop.permute.xlu0 %1181
        %vm1183 = vcmp.lt.s32.totalorder %v1014, %v1000
        %v1184 = vsel %vm1183, %v1178, %v1182
        %v1185 = vsel %vm1183, %v1182, %v1178
        %s1187 = sor.u32 256, 32
        %1188 = vrot.lane.b32.xlu0 %v938, %s1187
        %v1189 = vpop.permute.xlu0 %1188
        %s1191 = sor.u32 256, 32
        %1192 = vrot.lane.b32.xlu0 0.0, %s1191
        %v1193 = vpop.permute.xlu0 %1192
        %vm1194 = vcmp.lt.s32.totalorder %v1014, %v1001
        %v1195 = vsel %vm1194, %v1189, %v1193
        %v1196 = vsel %vm1194, %v1193, %v1189
        %s1198 = sor.u32 256, 40
        %1199 = vrot.lane.b32.xlu0 %v943, %s1198
        %v1200 = vpop.permute.xlu0 %1199
        %s1202 = sor.u32 256, 40
        %1203 = vrot.lane.b32.xlu0 0.0, %s1202
        %v1204 = vpop.permute.xlu0 %1203
        %vm1205 = vcmp.lt.s32.totalorder %v1014, %v1002
        %v1206 = vsel %vm1205, %v1200, %v1204
        %v1207 = vsel %vm1205, %v1204, %v1200
        %s1209 = sor.u32 256, 48
        %1210 = vrot.lane.b32.xlu0 %v948, %s1209
        %v1211 = vpop.permute.xlu0 %1210
        %s1213 = sor.u32 256, 48
        %1214 = vrot.lane.b32.xlu0 0.0, %s1213
        %v1215 = vpop.permute.xlu0 %1214
        %vm1216 = vcmp.lt.s32.totalorder %v1014, %v1003
        %v1217 = vsel %vm1216, %v1211, %v1215
        %v1218 = vsel %vm1216, %v1215, %v1211
        %s1220 = sor.u32 256, 56
        %1221 = vrot.lane.b32.xlu0 %v953, %s1220
        %v1222 = vpop.permute.xlu0 %1221
        %s1224 = sor.u32 256, 56
        %1225 = vrot.lane.b32.xlu0 0.0, %s1224
        %v1226 = vpop.permute.xlu0 %1225
        %vm1227 = vcmp.lt.s32.totalorder %v1014, %v1004
        %v1228 = vsel %vm1227, %v1222, %v1226
        %v1229 = vsel %vm1227, %v1226, %v1222
        %s1231 = sor.u32 256, 64
        %1232 = vrot.lane.b32.xlu0 %v958, %s1231
        %v1233 = vpop.permute.xlu0 %1232
        %s1235 = sor.u32 256, 64
        %1236 = vrot.lane.b32.xlu0 0.0, %s1235
        %v1237 = vpop.permute.xlu0 %1236
        %vm1238 = vcmp.lt.s32.totalorder %v1014, %v1005
        %v1239 = vsel %vm1238, %v1233, %v1237
        %v1240 = vsel %vm1238, %v1237, %v1233
        %s1242 = sor.u32 256, 72
        %1243 = vrot.lane.b32.xlu0 %v963, %s1242
        %v1244 = vpop.permute.xlu0 %1243
        %s1246 = sor.u32 256, 72
        %1247 = vrot.lane.b32.xlu0 0.0, %s1246
        %v1248 = vpop.permute.xlu0 %1247
        %vm1249 = vcmp.lt.s32.totalorder %v1014, %v1006
        %v1250 = vsel %vm1249, %v1244, %v1248
        %v1251 = vsel %vm1249, %v1248, %v1244
        %s1253 = sor.u32 256, 80
        %1254 = vrot.lane.b32.xlu0 %v968, %s1253
        %v1255 = vpop.permute.xlu0 %1254
        %s1257 = sor.u32 256, 80
        %1258 = vrot.lane.b32.xlu0 0.0, %s1257
        %v1259 = vpop.permute.xlu0 %1258
        %vm1260 = vcmp.lt.s32.totalorder %v1014, %v1007
        %v1261 = vsel %vm1260, %v1255, %v1259
        %v1262 = vsel %vm1260, %v1259, %v1255
        %s1264 = sor.u32 256, 88
        %1265 = vrot.lane.b32.xlu0 %v973, %s1264
        %v1266 = vpop.permute.xlu0 %1265
        %s1268 = sor.u32 256, 88
        %1269 = vrot.lane.b32.xlu0 0.0, %s1268
        %v1270 = vpop.permute.xlu0 %1269
        %vm1271 = vcmp.lt.s32.totalorder %v1014, %v1008
        %v1272 = vsel %vm1271, %v1266, %v1270
        %v1273 = vsel %vm1271, %v1270, %v1266
        %s1275 = sor.u32 256, 96
        %1276 = vrot.lane.b32.xlu0 %v978, %s1275
        %v1277 = vpop.permute.xlu0 %1276
        %s1279 = sor.u32 256, 96
        %1280 = vrot.lane.b32.xlu0 0.0, %s1279
        %v1281 = vpop.permute.xlu0 %1280
        %vm1282 = vcmp.lt.s32.totalorder %v1014, %v1009
        %v1283 = vsel %vm1282, %v1277, %v1281
        %v1284 = vsel %vm1282, %v1281, %v1277
        %s1286 = sor.u32 256, 104
        %1287 = vrot.lane.b32.xlu0 %v983, %s1286
        %v1288 = vpop.permute.xlu0 %1287
        %s1290 = sor.u32 256, 104
        %1291 = vrot.lane.b32.xlu0 0.0, %s1290
        %v1292 = vpop.permute.xlu0 %1291
        %vm1293 = vcmp.lt.s32.totalorder %v1014, %v1010
        %v1294 = vsel %vm1293, %v1288, %v1292
        %v1295 = vsel %vm1293, %v1292, %v1288
        %s1297 = sor.u32 256, 112
        %1298 = vrot.lane.b32.xlu0 %v988, %s1297
        %v1299 = vpop.permute.xlu0 %1298
        %s1301 = sor.u32 256, 112
        %1302 = vrot.lane.b32.xlu0 0.0, %s1301
        %v1303 = vpop.permute.xlu0 %1302
        %vm1304 = vcmp.lt.s32.totalorder %v1014, %v1011
        %v1305 = vsel %vm1304, %v1299, %v1303
        %v1306 = vsel %vm1304, %v1303, %v1299
        %s1308 = sor.u32 256, 120
        %1309 = vrot.lane.b32.xlu0 %v993, %s1308
        %v1310 = vpop.permute.xlu0 %1309
        %s1312 = sor.u32 256, 120
        %1313 = vrot.lane.b32.xlu0 0.0, %s1312
        %v1314 = vpop.permute.xlu0 %1313
        %vm1315 = vcmp.lt.s32.totalorder %v1014, %v1012
        %v1316 = vsel %vm1315, %v1310, %v1314
        %v1317 = vsel %vm1315, %v1314, %v1310
        %v1318 = vadd.f32 %v612, %v1152
        %v1319 = vadd.f32 %v773, %v1151
        %v1320 = vadd.f32 %v617, %v1163
        %v1321 = vadd.f32 %v778, %v1162
        %v1322 = vadd.f32 %v622, %v1174
        %v1323 = vadd.f32 %v783, %v1173
        %v1324 = vadd.f32 %v627, %v1185
        %v1325 = vadd.f32 %v788, %v1184
        %v1326 = vadd.f32 %v632, %v1196
        %v1327 = vadd.f32 %v793, %v1195
        %v1328 = vadd.f32 %v637, %v1207
        %v1329 = vadd.f32 %v798, %v1206
        %v1330 = vadd.f32 %v642, %v1218
        %v1331 = vadd.f32 %v803, %v1217
        %v1332 = vadd.f32 %v647, %v1229
        %v1333 = vadd.f32 %v808, %v1228
        %v1334 = vadd.f32 %v652, %v1240
        %v1335 = vadd.f32 %v813, %v1239
        %v1336 = vadd.f32 %v657, %v1251
        %v1337 = vadd.f32 %v818, %v1250
        %v1338 = vadd.f32 %v662, %v1262
        %v1339 = vadd.f32 %v823, %v1261
        %v1340 = vadd.f32 %v667, %v1273
        %v1341 = vadd.f32 %v828, %v1272
        %v1342 = vadd.f32 %v672, %v1284
        %v1343 = vadd.f32 %v833, %v1283
        %v1344 = vadd.f32 %v677, %v1295
        %v1345 = vadd.f32 %v838, %v1294
        %v1346 = vadd.f32 %v682, %v1306
        %v1347 = vadd.f32 %v843, %v1305
        %v1348 = vadd.f32 %v687, %v1317
        %v1349 = vadd.f32 %v848, %v1316
        %v1350 = vsel %vm1112, %v1318, -inf
        %v1351 = vsel %vm1113, %v1319, -inf
        %v1352 = vsel %vm1114, %v1320, -inf
        %v1353 = vsel %vm1115, %v1321, -inf
        %v1354 = vsel %vm1116, %v1322, -inf
        %v1355 = vsel %vm1117, %v1323, -inf
        %v1356 = vsel %vm1118, %v1324, -inf
        %v1357 = vsel %vm1119, %v1325, -inf
        %v1358 = vsel %vm1120, %v1326, -inf
        %v1359 = vsel %vm1121, %v1327, -inf
        %v1360 = vsel %vm1122, %v1328, -inf
        %v1361 = vsel %vm1123, %v1329, -inf
        %v1362 = vsel %vm1124, %v1330, -inf
        %v1363 = vsel %vm1125, %v1331, -inf
        %v1364 = vsel %vm1126, %v1332, -inf
        %v1365 = vsel %vm1127, %v1333, -inf
        %v1366 = vsel %vm1128, %v1334, -inf
        %v1367 = vsel %vm1129, %v1335, -inf
        %v1368 = vsel %vm1130, %v1336, -inf
        %v1369 = vsel %vm1131, %v1337, -inf
        %v1370 = vsel %vm1132, %v1338, -inf
        %v1371 = vsel %vm1133, %v1339, -inf
        %v1372 = vsel %vm1134, %v1340, -inf
        %v1373 = vsel %vm1135, %v1341, -inf
        %v1374 = vsel %vm1136, %v1342, -inf
        %v1375 = vsel %vm1137, %v1343, -inf
        %v1376 = vsel %vm1138, %v1344, -inf
        %v1377 = vsel %vm1139, %v1345, -inf
        %v1378 = vsel %vm1140, %v1346, -inf
        %v1379 = vsel %vm1141, %v1347, -inf
        %v1380 = vsel %vm1142, %v1348, -inf
        %v1381 = vsel %vm1143, %v1349, -inf
        %v1382 = vmax.f32 %v1350, %v1351
        %1383 = vmax.xlane.f32.xlu0 %v1382
        %v1384 = vpop.xlane.xlu0 %1383
        %v1385 = vmax.f32 %v1352, %v1353
        %1386 = vmax.xlane.f32.xlu0 %v1385
        %v1387 = vpop.xlane.xlu0 %1386
        %v1388 = vmax.f32 %v1354, %v1355
        %1389 = vmax.xlane.f32.xlu0 %v1388
        %v1390 = vpop.xlane.xlu0 %1389
        %v1391 = vmax.f32 %v1356, %v1357
        %1392 = vmax.xlane.f32.xlu0 %v1391
        %v1393 = vpop.xlane.xlu0 %1392
        %v1394 = vmax.f32 %v1358, %v1359
        %1395 = vmax.xlane.f32.xlu0 %v1394
        %v1396 = vpop.xlane.xlu0 %1395
        %v1397 = vmax.f32 %v1360, %v1361
        %1398 = vmax.xlane.f32.xlu0 %v1397
        %v1399 = vpop.xlane.xlu0 %1398
        %v1400 = vmax.f32 %v1362, %v1363
        %1401 = vmax.xlane.f32.xlu0 %v1400
        %v1402 = vpop.xlane.xlu0 %1401
        %v1403 = vmax.f32 %v1364, %v1365
        %1404 = vmax.xlane.f32.xlu0 %v1403
        %v1405 = vpop.xlane.xlu0 %1404
        %v1406 = vmax.f32 %v1366, %v1367
        %1407 = vmax.xlane.f32.xlu0 %v1406
        %v1408 = vpop.xlane.xlu0 %1407
        %v1409 = vmax.f32 %v1368, %v1369
        %1410 = vmax.xlane.f32.xlu0 %v1409
        %v1411 = vpop.xlane.xlu0 %1410
        %v1412 = vmax.f32 %v1370, %v1371
        %1413 = vmax.xlane.f32.xlu0 %v1412
        %v1414 = vpop.xlane.xlu0 %1413
        %v1415 = vmax.f32 %v1372, %v1373
        %1416 = vmax.xlane.f32.xlu0 %v1415
        %v1417 = vpop.xlane.xlu0 %1416
        %v1418 = vmax.f32 %v1374, %v1375
        %1419 = vmax.xlane.f32.xlu0 %v1418
        %v1420 = vpop.xlane.xlu0 %1419
        %v1421 = vmax.f32 %v1376, %v1377
        %1422 = vmax.xlane.f32.xlu0 %v1421
        %v1423 = vpop.xlane.xlu0 %1422
        %v1424 = vmax.f32 %v1378, %v1379
        %1425 = vmax.xlane.f32.xlu0 %v1424
        %v1426 = vpop.xlane.xlu0 %1425
        %v1427 = vmax.f32 %v1380, %v1381
        %1428 = vmax.xlane.f32.xlu0 %v1427
        %v1429 = vpop.xlane.xlu0 %1428
        %v1430 = vsub.f32 %v1350, %v1384
        %v1431 = vsub.f32 %v1351, %v1384
        %v1432 = vsub.f32 %v1352, %v1387
        %v1433 = vsub.f32 %v1353, %v1387
        %v1434 = vsub.f32 %v1354, %v1390
        %v1435 = vsub.f32 %v1355, %v1390
        %v1436 = vsub.f32 %v1356, %v1393
        %v1437 = vsub.f32 %v1357, %v1393
        %v1438 = vsub.f32 %v1358, %v1396
        %v1439 = vsub.f32 %v1359, %v1396
        %v1440 = vsub.f32 %v1360, %v1399
        %v1441 = vsub.f32 %v1361, %v1399
        %v1442 = vsub.f32 %v1362, %v1402
        %v1443 = vsub.f32 %v1363, %v1402
        %v1444 = vsub.f32 %v1364, %v1405
        %v1445 = vsub.f32 %v1365, %v1405
        %v1446 = vsub.f32 %v1366, %v1408
        %v1447 = vsub.f32 %v1367, %v1408
        %v1448 = vsub.f32 %v1368, %v1411
        %v1449 = vsub.f32 %v1369, %v1411
        %v1450 = vsub.f32 %v1370, %v1414
        %v1451 = vsub.f32 %v1371, %v1414
        %v1452 = vsub.f32 %v1372, %v1417
        %v1453 = vsub.f32 %v1373, %v1417
        %v1454 = vsub.f32 %v1374, %v1420
        %v1455 = vsub.f32 %v1375, %v1420
        %v1456 = vsub.f32 %v1376, %v1423
        %v1457 = vsub.f32 %v1377, %v1423
        %v1458 = vsub.f32 %v1378, %v1426
        %v1459 = vsub.f32 %v1379, %v1426
        %v1460 = vsub.f32 %v1380, %v1429
        %v1461 = vsub.f32 %v1381, %v1429
        %v1462 = vmul.f32 %v1430, 1.442695
        %v1463 = vpow.pop %v1462
        %v1464 = vmul.f32 %v1431, 1.442695
        %v1465 = vpow.pop %v1464
        %v1466 = vmul.f32 %v1432, 1.442695
        %v1467 = vpow.pop %v1466
        %v1468 = vmul.f32 %v1433, 1.442695
        %v1469 = vpow.pop %v1468
        %v1470 = vmul.f32 %v1434, 1.442695
        %v1471 = vpow.pop %v1470
        %v1472 = vmul.f32 %v1435, 1.442695
        %v1473 = vpow.pop %v1472
        %v1474 = vmul.f32 %v1436, 1.442695
        %v1475 = vpow.pop %v1474
        %v1476 = vmul.f32 %v1437, 1.442695
        %v1477 = vpow.pop %v1476
        %v1478 = vmul.f32 %v1438, 1.442695
        %v1479 = vpow.pop %v1478
        %v1480 = vmul.f32 %v1439, 1.442695
        %v1481 = vpow.pop %v1480
        %v1482 = vmul.f32 %v1440, 1.442695
        %v1483 = vpow.pop %v1482
        %v1484 = vmul.f32 %v1441, 1.442695
        %v1485 = vpow.pop %v1484
        %v1486 = vmul.f32 %v1442, 1.442695
        %v1487 = vpow.pop %v1486
        %v1488 = vmul.f32 %v1443, 1.442695
        %v1489 = vpow.pop %v1488
        %v1490 = vmul.f32 %v1444, 1.442695
        %v1491 = vpow.pop %v1490
        %v1492 = vmul.f32 %v1445, 1.442695
        %v1493 = vpow.pop %v1492
        %v1494 = vmul.f32 %v1446, 1.442695
        %v1495 = vpow.pop %v1494
        %v1496 = vmul.f32 %v1447, 1.442695
        %v1497 = vpow.pop %v1496
        %v1498 = vmul.f32 %v1448, 1.442695
        %v1499 = vpow.pop %v1498
        %v1500 = vmul.f32 %v1449, 1.442695
        %v1501 = vpow.pop %v1500
        %v1502 = vmul.f32 %v1450, 1.442695
        %v1503 = vpow.pop %v1502
        %v1504 = vmul.f32 %v1451, 1.442695
        %v1505 = vpow.pop %v1504
        %v1506 = vmul.f32 %v1452, 1.442695
        %v1507 = vpow.pop %v1506
        %v1508 = vmul.f32 %v1453, 1.442695
        %v1509 = vpow.pop %v1508
        %v1510 = vmul.f32 %v1454, 1.442695
        %v1511 = vpow.pop %v1510
        %v1512 = vmul.f32 %v1455, 1.442695
        %v1513 = vpow.pop %v1512
        %v1514 = vmul.f32 %v1456, 1.442695
        %v1515 = vpow.pop %v1514
        %v1516 = vmul.f32 %v1457, 1.442695
        %v1517 = vpow.pop %v1516
        %v1518 = vmul.f32 %v1458, 1.442695
        %v1519 = vpow.pop %v1518
        %v1520 = vmul.f32 %v1459, 1.442695
        %v1521 = vpow.pop %v1520
        %v1522 = vmul.f32 %v1460, 1.442695
        %v1523 = vpow.pop %v1522
        %v1524 = vmul.f32 %v1461, 1.442695
        %v1525 = vpow.pop %v1524
        %v1526 = vsel %vm1112, %v1463, 0.0
        %v1527 = vsel %vm1113, %v1465, 0.0
        %v1528 = vsel %vm1114, %v1467, 0.0
        %v1529 = vsel %vm1115, %v1469, 0.0
        %v1530 = vsel %vm1116, %v1471, 0.0
        %v1531 = vsel %vm1117, %v1473, 0.0
        %v1532 = vsel %vm1118, %v1475, 0.0
        %v1533 = vsel %vm1119, %v1477, 0.0
        %v1534 = vsel %vm1120, %v1479, 0.0
        %v1535 = vsel %vm1121, %v1481, 0.0
        %v1536 = vsel %vm1122, %v1483, 0.0
        %v1537 = vsel %vm1123, %v1485, 0.0
        %v1538 = vsel %vm1124, %v1487, 0.0
        %v1539 = vsel %vm1125, %v1489, 0.0
        %v1540 = vsel %vm1126, %v1491, 0.0
        %v1541 = vsel %vm1127, %v1493, 0.0
        %v1542 = vsel %vm1128, %v1495, 0.0
        %v1543 = vsel %vm1129, %v1497, 0.0
        %v1544 = vsel %vm1130, %v1499, 0.0
        %v1545 = vsel %vm1131, %v1501, 0.0
        %v1546 = vsel %vm1132, %v1503, 0.0
        %v1547 = vsel %vm1133, %v1505, 0.0
        %v1548 = vsel %vm1134, %v1507, 0.0
        %v1549 = vsel %vm1135, %v1509, 0.0
        %v1550 = vsel %vm1136, %v1511, 0.0
        %v1551 = vsel %vm1137, %v1513, 0.0
        %v1552 = vsel %vm1138, %v1515, 0.0
        %v1553 = vsel %vm1139, %v1517, 0.0
        %v1554 = vsel %vm1140, %v1519, 0.0
        %v1555 = vsel %vm1141, %v1521, 0.0
        %v1556 = vsel %vm1142, %v1523, 0.0
        %v1557 = vsel %vm1143, %v1525, 0.0
        %v1558 = vadd.f32 %v1526, %v1527
        %1559 = vadd.xlane.f32.xlu0 %v1558
        %v1560 = vpop.xlane.xlu0 %1559
        %v1561 = vadd.f32 %v1528, %v1529
        %1562 = vadd.xlane.f32.xlu0 %v1561
        %v1563 = vpop.xlane.xlu0 %1562
        %v1564 = vadd.f32 %v1530, %v1531
        %1565 = vadd.xlane.f32.xlu0 %v1564
        %v1566 = vpop.xlane.xlu0 %1565
        %v1567 = vadd.f32 %v1532, %v1533
        %1568 = vadd.xlane.f32.xlu0 %v1567
        %v1569 = vpop.xlane.xlu0 %1568
        %v1570 = vadd.f32 %v1534, %v1535
        %1571 = vadd.xlane.f32.xlu0 %v1570
        %v1572 = vpop.xlane.xlu0 %1571
        %v1573 = vadd.f32 %v1536, %v1537
        %1574 = vadd.xlane.f32.xlu0 %v1573
        %v1575 = vpop.xlane.xlu0 %1574
        %v1576 = vadd.f32 %v1538, %v1539
        %1577 = vadd.xlane.f32.xlu0 %v1576
        %v1578 = vpop.xlane.xlu0 %1577
        %v1579 = vadd.f32 %v1540, %v1541
        %1580 = vadd.xlane.f32.xlu0 %v1579
        %v1581 = vpop.xlane.xlu0 %1580
        %v1582 = vadd.f32 %v1542, %v1543
        %1583 = vadd.xlane.f32.xlu0 %v1582
        %v1584 = vpop.xlane.xlu0 %1583
        %v1585 = vadd.f32 %v1544, %v1545
        %1586 = vadd.xlane.f32.xlu0 %v1585
        %v1587 = vpop.xlane.xlu0 %1586
        %v1588 = vadd.f32 %v1546, %v1547
        %1589 = vadd.xlane.f32.xlu0 %v1588
        %v1590 = vpop.xlane.xlu0 %1589
        %v1591 = vadd.f32 %v1548, %v1549
        %1592 = vadd.xlane.f32.xlu0 %v1591
        %v1593 = vpop.xlane.xlu0 %1592
        %v1594 = vadd.f32 %v1550, %v1551
        %1595 = vadd.xlane.f32.xlu0 %v1594
        %v1596 = vpop.xlane.xlu0 %1595
        %v1597 = vadd.f32 %v1552, %v1553
        %1598 = vadd.xlane.f32.xlu0 %v1597
        %v1599 = vpop.xlane.xlu0 %1598
        %v1600 = vadd.f32 %v1554, %v1555
        %1601 = vadd.xlane.f32.xlu0 %v1600
        %v1602 = vpop.xlane.xlu0 %1601
        %v1603 = vadd.f32 %v1556, %v1557
        %1604 = vadd.xlane.f32.xlu0 %v1603
        %v1605 = vpop.xlane.xlu0 %1604
        %v1606 = vrcp.pop %v1560
        %v1607 = vrcp.pop %v1563
        %v1608 = vrcp.pop %v1566
        %v1609 = vrcp.pop %v1569
        %v1610 = vrcp.pop %v1572
        %v1611 = vrcp.pop %v1575
        %v1612 = vrcp.pop %v1578
        %v1613 = vrcp.pop %v1581
        %v1614 = vrcp.pop %v1584
        %v1615 = vrcp.pop %v1587
        %v1616 = vrcp.pop %v1590
        %v1617 = vrcp.pop %v1593
        %v1618 = vrcp.pop %v1596
        %v1619 = vrcp.pop %v1599
        %v1620 = vrcp.pop %v1602
        %v1621 = vrcp.pop %v1605
        %v1622 = vmul.f32 %v1526, %v1606
        %v1623 = vmul.f32 %v1527, %v1606
        %v1624 = vmul.f32 %v1528, %v1607
        %v1625 = vmul.f32 %v1529, %v1607
        %v1626 = vmul.f32 %v1530, %v1608
        %v1627 = vmul.f32 %v1531, %v1608
        %v1628 = vmul.f32 %v1532, %v1609
        %v1629 = vmul.f32 %v1533, %v1609
        %v1630 = vmul.f32 %v1534, %v1610
        %v1631 = vmul.f32 %v1535, %v1610
        %v1632 = vmul.f32 %v1536, %v1611
        %v1633 = vmul.f32 %v1537, %v1611
        %v1634 = vmul.f32 %v1538, %v1612
        %v1635 = vmul.f32 %v1539, %v1612
        %v1636 = vmul.f32 %v1540, %v1613
        %v1637 = vmul.f32 %v1541, %v1613
        %v1638 = vmul.f32 %v1542, %v1614
        %v1639 = vmul.f32 %v1543, %v1614
        %v1640 = vmul.f32 %v1544, %v1615
        %v1641 = vmul.f32 %v1545, %v1615
        %v1642 = vmul.f32 %v1546, %v1616
        %v1643 = vmul.f32 %v1547, %v1616
        %v1644 = vmul.f32 %v1548, %v1617
        %v1645 = vmul.f32 %v1549, %v1617
        %v1646 = vmul.f32 %v1550, %v1618
        %v1647 = vmul.f32 %v1551, %v1618
        %v1648 = vmul.f32 %v1552, %v1619
        %v1649 = vmul.f32 %v1553, %v1619
        %v1650 = vmul.f32 %v1554, %v1620
        %v1651 = vmul.f32 %v1555, %v1620
        %v1652 = vmul.f32 %v1556, %v1621
        %v1653 = vmul.f32 %v1557, %v1621
        %v1654 = vld [vmem:[%s415] sm:$0xff]
        %v1655 = vld [vmem:[%s415 + $0x8] sm:$0xff]
        %v1656 = vld [vmem:[%s415 + $0x10] sm:$0xff]
        %v1657 = vld [vmem:[%s415 + $0x18] sm:$0xff]
        %v1658 = vld [vmem:[%s415 + $0x20] sm:$0xff]
        %v1659 = vld [vmem:[%s415 + $0x28] sm:$0xff]
        %v1660 = vld [vmem:[%s415 + $0x30] sm:$0xff]
        %v1661 = vld [vmem:[%s415 + $0x38] sm:$0xff]
        %v1662 = vld [vmem:[%s415 + $0x40] sm:$0xff]
        %v1663 = vld [vmem:[%s415 + $0x48] sm:$0xff]
        %v1664 = vld [vmem:[%s415 + $0x50] sm:$0xff]
        %v1665 = vld [vmem:[%s415 + $0x58] sm:$0xff]
        %v1666 = vld [vmem:[%s415 + $0x60] sm:$0xff]
        %v1667 = vld [vmem:[%s415 + $0x68] sm:$0xff]
        %v1668 = vld [vmem:[%s415 + $0x70] sm:$0xff]
        %v1669 = vld [vmem:[%s415 + $0x78] sm:$0xff]
        %v1670 = vld [vmem:[%s424] sm:$0xff]
        %v1671 = vld [vmem:[%s424 + $0x8] sm:$0xff]
        %v1672 = vld [vmem:[%s424 + $0x10] sm:$0xff]
        %v1673 = vld [vmem:[%s424 + $0x18] sm:$0xff]
        %v1674 = vld [vmem:[%s424 + $0x20] sm:$0xff]
        %v1675 = vld [vmem:[%s424 + $0x28] sm:$0xff]
        %v1676 = vld [vmem:[%s424 + $0x30] sm:$0xff]
        %v1677 = vld [vmem:[%s424 + $0x38] sm:$0xff]
        %v1678 = vld [vmem:[%s424 + $0x40] sm:$0xff]
        %v1679 = vld [vmem:[%s424 + $0x48] sm:$0xff]
        %v1680 = vld [vmem:[%s424 + $0x50] sm:$0xff]
        %v1681 = vld [vmem:[%s424 + $0x58] sm:$0xff]
        %v1682 = vld [vmem:[%s424 + $0x60] sm:$0xff]
        %v1683 = vld [vmem:[%s424 + $0x68] sm:$0xff]
        %v1684 = vld [vmem:[%s424 + $0x70] sm:$0xff]
        %v1685 = vld [vmem:[%s424 + $0x78] sm:$0xff]
        %1686 = vmatprep.subr.mxu0 0.0
        %1687 = vmatpush1.msra.mxu0 %v1670
        %1688 = vmatprep.subr.mxu0 0.0
        %1689 = vmatpush1.msra.mxu0 %v1671
        %1690 = vmatprep.subr.mxu0 0.0
        %1691 = vmatpush1.msra.mxu0 %v1672
        %1692 = vmatprep.subr.mxu0 0.0
        %1693 = vmatpush1.msra.mxu0 %v1673
        %1694 = vmatprep.subr.mxu0 0.0
        %1695 = vmatpush1.msra.mxu0 %v1674
        %1696 = vmatprep.subr.mxu0 0.0
        %1697 = vmatpush1.msra.mxu0 %v1675
        %1698 = vmatprep.subr.mxu0 0.0
        %1699 = vmatpush1.msra.mxu0 %v1676
        %1700 = vmatprep.subr.mxu0 0.0
        %1701 = vmatpush1.msra.mxu0 %v1677
        %1702 = vmatprep.subr.mxu0 0.0
        %1703 = vmatpush1.msra.mxu0 %v1678
        %1704 = vmatprep.subr.mxu0 0.0
        %1705 = vmatpush1.msra.mxu0 %v1679
        %1706 = vmatprep.subr.mxu0 0.0
        %1707 = vmatpush1.msra.mxu0 %v1680
        %1708 = vmatprep.subr.mxu0 0.0
        %1709 = vmatpush1.msra.mxu0 %v1681
        %1710 = vmatprep.subr.mxu0 0.0
        %1711 = vmatpush1.msra.mxu0 %v1682
        %1712 = vmatprep.subr.mxu0 0.0
        %1713 = vmatpush1.msra.mxu0 %v1683
        %1714 = vmatprep.subr.mxu0 0.0
        %1715 = vmatpush1.msra.mxu0 %v1684
        %1716 = vmatprep.subr.mxu0 0.0
        %1717 = vmatpush1.msra.mxu0 %v1685
        %1718 = vmatprep.subr.mxu0 0.0
        %1719 = vmatpush1.msra.mxu0 0.0
        %1720 = vmatprep.subr.mxu0 0.0
        %1721 = vmatpush1.msra.mxu0 0.0
        %1722 = vmatprep.subr.mxu0 0.0
        %1723 = vmatpush1.msra.mxu0 0.0
        %1724 = vmatprep.subr.mxu0 0.0
        %1725 = vmatpush1.msra.mxu0 0.0
        %1726 = vmatprep.subr.mxu0 0.0
        %1727 = vmatpush1.msra.mxu0 0.0
        %1728 = vmatprep.subr.mxu0 0.0
        %1729 = vmatpush1.msra.mxu0 0.0
        %1730 = vmatprep.subr.mxu0 0.0
        %1731 = vmatpush1.msra.mxu0 0.0
        %1732 = vmatprep.subr.mxu0 0.0
        %1733 = vmatpush1.msra.mxu0 0.0
        %1734 = vmatprep.subr.mxu0 0.0
        %1735 = vmatpush1.msra.mxu0 0.0
        %1736 = vmatprep.subr.mxu0 0.0
        %1737 = vmatpush1.msra.mxu0 0.0
        %1738 = vmatprep.subr.mxu0 0.0
        %1739 = vmatpush1.msra.mxu0 0.0
        %1740 = vmatprep.subr.mxu0 0.0
        %1741 = vmatpush1.msra.mxu0 0.0
        %1742 = vmatprep.subr.mxu0 0.0
        %1743 = vmatpush1.msra.mxu0 0.0
        %1744 = vmatprep.subr.mxu0 0.0
        %1745 = vmatpush1.msra.mxu0 0.0
        %1746 = vmatprep.subr.mxu0 0.0
        %1747 = vmatpush1.msra.mxu0 0.0
        %1748 = vmatprep.subr.mxu0 0.0
        %1749 = vmatpush1.msra.mxu0 0.0
        %1750 = vmatprep.mubr.f32.mxu0 0.0
        %1751 = vmatmul.mubr.f32.gmra.mrb[0].mxu0 %v1623
        %v1752 = vpop.f32.mrb[0].mxu0
        %v1753 = vadd.f32 0.0, %v1752
        %v1754 = vpop.f32.mrb[0].mxu0
        %1755 = vmatprep.mubr.f32.mxu0 0.0
        %1756 = vmatmul.mubr.f32.gmra.mrb[0].mxu0 %v1625
        %v1757 = vpop.f32.mrb[0].mxu0
        %v1758 = vadd.f32 0.0, %v1757
        %v1759 = vpop.f32.mrb[0].mxu0
        %1760 = vmatprep.mubr.f32.mxu0 0.0
        %1761 = vmatmul.mubr.f32.gmra.mrb[0].mxu0 %v1627
        %v1762 = vpop.f32.mrb[0].mxu0
        %v1763 = vadd.f32 0.0, %v1762
        %v1764 = vpop.f32.mrb[0].mxu0
        %1765 = vmatprep.mubr.f32.mxu0 0.0
        %1766 = vmatmul.mubr.f32.gmra.mrb[0].mxu0 %v1629
        %v1767 = vpop.f32.mrb[0].mxu0
        %v1768 = vadd.f32 0.0, %v1767
        %v1769 = vpop.f32.mrb[0].mxu0
        %1770 = vmatprep.mubr.f32.mxu0 0.0
        %1771 = vmatmul.mubr.f32.gmra.mrb[0].mxu0 %v1631
        %v1772 = vpop.f32.mrb[0].mxu0
        %v1773 = vadd.f32 0.0, %v1772
        %v1774 = vpop.f32.mrb[0].mxu0
        %1775 = vmatprep.mubr.f32.mxu0 0.0
        %1776 = vmatmul.mubr.f32.gmra.mrb[0].mxu0 %v1633
        %v1777 = vpop.f32.mrb[0].mxu0
        %v1778 = vadd.f32 0.0, %v1777
        %v1779 = vpop.f32.mrb[0].mxu0
        %1780 = vmatprep.mubr.f32.mxu0 0.0
        %1781 = vmatmul.mubr.f32.gmra.mrb[0].mxu0 %v1635
        %v1782 = vpop.f32.mrb[0].mxu0
        %v1783 = vadd.f32 0.0, %v1782
        %v1784 = vpop.f32.mrb[0].mxu0
        %1785 = vmatprep.mubr.f32.mxu0 0.0
        %1786 = vmatmul.mubr.f32.gmra.mrb[0].mxu0 %v1637
        %v1787 = vpop.f32.mrb[0].mxu0
        %v1788 = vadd.f32 0.0, %v1787
        %v1789 = vpop.f32.mrb[0].mxu0
        %1790 = vmatprep.mubr.f32.mxu0 0.0
        %1791 = vmatmul.mubr.f32.gmra.mrb[0].mxu0 %v1639
        %v1792 = vpop.f32.mrb[0].mxu0
        %v1793 = vadd.f32 0.0, %v1792
        %v1794 = vpop.f32.mrb[0].mxu0
        %1795 = vmatprep.mubr.f32.mxu0 0.0
        %1796 = vmatmul.mubr.f32.gmra.mrb[0].mxu0 %v1641
        %v1797 = vpop.f32.mrb[0].mxu0
        %v1798 = vadd.f32 0.0, %v1797
        %v1799 = vpop.f32.mrb[0].mxu0
        %1800 = vmatprep.mubr.f32.mxu0 0.0
        %1801 = vmatmul.mubr.f32.gmra.mrb[0].mxu0 %v1643
        %v1802 = vpop.f32.mrb[0].mxu0
        %v1803 = vadd.f32 0.0, %v1802
        %v1804 = vpop.f32.mrb[0].mxu0
        %1805 = vmatprep.mubr.f32.mxu0 0.0
        %1806 = vmatmul.mubr.f32.gmra.mrb[0].mxu0 %v1645
        %v1807 = vpop.f32.mrb[0].mxu0
        %v1808 = vadd.f32 0.0, %v1807
        %v1809 = vpop.f32.mrb[0].mxu0
        %1810 = vmatprep.mubr.f32.mxu0 0.0
        %1811 = vmatmul.mubr.f32.gmra.mrb[0].mxu0 %v1647
        %v1812 = vpop.f32.mrb[0].mxu0
        %v1813 = vadd.f32 0.0, %v1812
        %v1814 = vpop.f32.mrb[0].mxu0
        %1815 = vmatprep.mubr.f32.mxu0 0.0
        %1816 = vmatmul.mubr.f32.gmra.mrb[0].mxu0 %v1649
        %v1817 = vpop.f32.mrb[0].mxu0
        %v1818 = vadd.f32 0.0, %v1817
        %v1819 = vpop.f32.mrb[0].mxu0
        %1820 = vmatprep.mubr.f32.mxu0 0.0
        %1821 = vmatmul.mubr.f32.gmra.mrb[0].mxu0 %v1651
        %v1822 = vpop.f32.mrb[0].mxu0
        %v1823 = vadd.f32 0.0, %v1822
        %v1824 = vpop.f32.mrb[0].mxu0
        %1825 = vmatprep.mubr.f32.mxu0 0.0
        %1826 = vmatmul.mubr.f32.gmra.mrb[0].mxu0 %v1653
        %v1827 = vpop.f32.mrb[0].mxu0
        %v1828 = vadd.f32 0.0, %v1827
        %v1829 = vpop.f32.mrb[0].mxu0
        %1830 = vdwg.mxu0
        %1831 = vmatprep.subr.mxu0 0.0
        %1832 = vmatpush1.msra.mxu0 %v1654
        %1833 = vmatprep.subr.mxu0 0.0
        %1834 = vmatpush1.msra.mxu0 %v1655
        %1835 = vmatprep.subr.mxu0 0.0
        %1836 = vmatpush1.msra.mxu0 %v1656
        %1837 = vmatprep.subr.mxu0 0.0
        %1838 = vmatpush1.msra.mxu0 %v1657
        %1839 = vmatprep.subr.mxu0 0.0
        %1840 = vmatpush1.msra.mxu0 %v1658
        %1841 = vmatprep.subr.mxu0 0.0
        %1842 = vmatpush1.msra.mxu0 %v1659
        %1843 = vmatprep.subr.mxu0 0.0
        %1844 = vmatpush1.msra.mxu0 %v1660
        %1845 = vmatprep.subr.mxu0 0.0
        %1846 = vmatpush1.msra.mxu0 %v1661
        %1847 = vmatprep.subr.mxu0 0.0
        %1848 = vmatpush1.msra.mxu0 %v1662
        %1849 = vmatprep.subr.mxu0 0.0
        %1850 = vmatpush1.msra.mxu0 %v1663
        %1851 = vmatprep.subr.mxu0 0.0
        %1852 = vmatpush1.msra.mxu0 %v1664
        %1853 = vmatprep.subr.mxu0 0.0
        %1854 = vmatpush1.msra.mxu0 %v1665
        %1855 = vmatprep.subr.mxu0 0.0
        %1856 = vmatpush1.msra.mxu0 %v1666
        %1857 = vmatprep.subr.mxu0 0.0
        %1858 = vmatpush1.msra.mxu0 %v1667
        %1859 = vmatprep.subr.mxu0 0.0
        %1860 = vmatpush1.msra.mxu0 %v1668
        %1861 = vmatprep.subr.mxu0 0.0
        %1862 = vmatpush1.msra.mxu0 %v1669
        %1863 = vmatprep.subr.mxu0 0.0
        %1864 = vmatpush1.msra.mxu0 0.0
        %1865 = vmatprep.subr.mxu0 0.0
        %1866 = vmatpush1.msra.mxu0 0.0
        %1867 = vmatprep.subr.mxu0 0.0
        %1868 = vmatpush1.msra.mxu0 0.0
        %1869 = vmatprep.subr.mxu0 0.0
        %1870 = vmatpush1.msra.mxu0 0.0
        %1871 = vmatprep.subr.mxu0 0.0
        %1872 = vmatpush1.msra.mxu0 0.0
        %1873 = vmatprep.subr.mxu0 0.0
        %1874 = vmatpush1.msra.mxu0 0.0
        %1875 = vmatprep.subr.mxu0 0.0
        %1876 = vmatpush1.msra.mxu0 0.0
        %1877 = vmatprep.subr.mxu0 0.0
        %1878 = vmatpush1.msra.mxu0 0.0
        %1879 = vmatprep.subr.mxu0 0.0
        %1880 = vmatpush1.msra.mxu0 0.0
        %1881 = vmatprep.subr.mxu0 0.0
        %1882 = vmatpush1.msra.mxu0 0.0
        %1883 = vmatprep.subr.mxu0 0.0
        %1884 = vmatpush1.msra.mxu0 0.0
        %1885 = vmatprep.subr.mxu0 0.0
        %1886 = vmatpush1.msra.mxu0 0.0
        %1887 = vmatprep.subr.mxu0 0.0
        %1888 = vmatpush1.msra.mxu0 0.0
        %1889 = vmatprep.subr.mxu0 0.0
        %1890 = vmatpush1.msra.mxu0 0.0
        %1891 = vmatprep.subr.mxu0 0.0
        %1892 = vmatpush1.msra.mxu0 0.0
        %1893 = vmatprep.subr.mxu0 0.0
        %1894 = vmatpush1.msra.mxu0 0.0
        %1895 = vmatprep.mubr.f32.mxu0 0.0
        %1896 = vmatmul.mubr.f32.gmra.mrb[0].mxu0 %v1622
        %v1897 = vpop.f32.mrb[0].mxu0
        %v1898 = vadd.f32 %v1753, %v1897
        %v1899 = vpop.f32.mrb[0].mxu0
        %1900 = vmatprep.mubr.f32.mxu0 0.0
        %1901 = vmatmul.mubr.f32.gmra.mrb[0].mxu0 %v1624
        %v1902 = vpop.f32.mrb[0].mxu0
        %v1903 = vadd.f32 %v1758, %v1902
        %v1904 = vpop.f32.mrb[0].mxu0
        %1905 = vmatprep.mubr.f32.mxu0 0.0
        %1906 = vmatmul.mubr.f32.gmra.mrb[0].mxu0 %v1626
        %v1907 = vpop.f32.mrb[0].mxu0
        %v1908 = vadd.f32 %v1763, %v1907
        %v1909 = vpop.f32.mrb[0].mxu0
        %1910 = vmatprep.mubr.f32.mxu0 0.0
        %1911 = vmatmul.mubr.f32.gmra.mrb[0].mxu0 %v1628
        %v1912 = vpop.f32.mrb[0].mxu0
        %v1913 = vadd.f32 %v1768, %v1912
        %v1914 = vpop.f32.mrb[0].mxu0
        %1915 = vmatprep.mubr.f32.mxu0 0.0
        %1916 = vmatmul.mubr.f32.gmra.mrb[0].mxu0 %v1630
        %v1917 = vpop.f32.mrb[0].mxu0
        %v1918 = vadd.f32 %v1773, %v1917
        %v1919 = vpop.f32.mrb[0].mxu0
        %1920 = vmatprep.mubr.f32.mxu0 0.0
        %1921 = vmatmul.mubr.f32.gmra.mrb[0].mxu0 %v1632
        %v1922 = vpop.f32.mrb[0].mxu0
        %v1923 = vadd.f32 %v1778, %v1922
        %v1924 = vpop.f32.mrb[0].mxu0
        %1925 = vmatprep.mubr.f32.mxu0 0.0
        %1926 = vmatmul.mubr.f32.gmra.mrb[0].mxu0 %v1634
        %v1927 = vpop.f32.mrb[0].mxu0
        %v1928 = vadd.f32 %v1783, %v1927
        %v1929 = vpop.f32.mrb[0].mxu0
        %1930 = vmatprep.mubr.f32.mxu0 0.0
        %1931 = vmatmul.mubr.f32.gmra.mrb[0].mxu0 %v1636
        %v1932 = vpop.f32.mrb[0].mxu0
        %v1933 = vadd.f32 %v1788, %v1932
        %v1934 = vpop.f32.mrb[0].mxu0
        %1935 = vmatprep.mubr.f32.mxu0 0.0
        %1936 = vmatmul.mubr.f32.gmra.mrb[0].mxu0 %v1638
        %v1937 = vpop.f32.mrb[0].mxu0
        %v1938 = vadd.f32 %v1793, %v1937
        %v1939 = vpop.f32.mrb[0].mxu0
        %1940 = vmatprep.mubr.f32.mxu0 0.0
        %1941 = vmatmul.mubr.f32.gmra.mrb[0].mxu0 %v1640
        %v1942 = vpop.f32.mrb[0].mxu0
        %v1943 = vadd.f32 %v1798, %v1942
        %v1944 = vpop.f32.mrb[0].mxu0
        %1945 = vmatprep.mubr.f32.mxu0 0.0
        %1946 = vmatmul.mubr.f32.gmra.mrb[0].mxu0 %v1642
        %v1947 = vpop.f32.mrb[0].mxu0
        %v1948 = vadd.f32 %v1803, %v1947
        %v1949 = vpop.f32.mrb[0].mxu0
        %1950 = vmatprep.mubr.f32.mxu0 0.0
        %1951 = vmatmul.mubr.f32.gmra.mrb[0].mxu0 %v1644
        %v1952 = vpop.f32.mrb[0].mxu0
        %v1953 = vadd.f32 %v1808, %v1952
        %v1954 = vpop.f32.mrb[0].mxu0
        %1955 = vmatprep.mubr.f32.mxu0 0.0
        %1956 = vmatmul.mubr.f32.gmra.mrb[0].mxu0 %v1646
        %v1957 = vpop.f32.mrb[0].mxu0
        %v1958 = vadd.f32 %v1813, %v1957
        %v1959 = vpop.f32.mrb[0].mxu0
        %1960 = vmatprep.mubr.f32.mxu0 0.0
        %1961 = vmatmul.mubr.f32.gmra.mrb[0].mxu0 %v1648
        %v1962 = vpop.f32.mrb[0].mxu0
        %v1963 = vadd.f32 %v1818, %v1962
        %v1964 = vpop.f32.mrb[0].mxu0
        %1965 = vmatprep.mubr.f32.mxu0 0.0
        %1966 = vmatmul.mubr.f32.gmra.mrb[0].mxu0 %v1650
        %v1967 = vpop.f32.mrb[0].mxu0
        %v1968 = vadd.f32 %v1823, %v1967
        %v1969 = vpop.f32.mrb[0].mxu0
        %1970 = vmatprep.mubr.f32.mxu0 0.0
        %1971 = vmatmul.mubr.f32.gmra.mrb[0].mxu0 %v1652
        %v1972 = vpop.f32.mrb[0].mxu0
        %v1973 = vadd.f32 %v1828, %v1972
        %v1974 = vpop.f32.mrb[0].mxu0
        %1975 = vdwg.mxu0
        %1976 = vst [vmem:[%s472] sm:$0xff] %v1898
        %1977 = vst [vmem:[%s472 + $0x8] sm:$0xff] %v1903
        %1978 = vst [vmem:[%s472 + $0x10] sm:$0xff] %v1908
        %1979 = vst [vmem:[%s472 + $0x18] sm:$0xff] %v1913
        %1980 = vst [vmem:[%s472 + $0x20] sm:$0xff] %v1918
        %1981 = vst [vmem:[%s472 + $0x28] sm:$0xff] %v1923
        %1982 = vst [vmem:[%s472 + $0x30] sm:$0xff] %v1928
        %1983 = vst [vmem:[%s472 + $0x38] sm:$0xff] %v1933
        %1984 = vst [vmem:[%s472 + $0x40] sm:$0xff] %v1938
        %1985 = vst [vmem:[%s472 + $0x48] sm:$0xff] %v1943
        %1986 = vst [vmem:[%s472 + $0x50] sm:$0xff] %v1948
        %1987 = vst [vmem:[%s472 + $0x58] sm:$0xff] %v1953
        %1988 = vst [vmem:[%s472 + $0x60] sm:$0xff] %v1958
        %1989 = vst [vmem:[%s472 + $0x68] sm:$0xff] %v1963
        %1990 = vst [vmem:[%s472 + $0x70] sm:$0xff] %v1968
        %1991 = vst [vmem:[%s472 + $0x78] sm:$0xff] %v1973
        %s1992 = sand.u32 %s211, 1
        %s1993 = scalar_lea.sflag [#allocation4], %s1992
        %s1994 = sand.u32 %s211, 1
        %s1995 = smul.addr %s1994, 128
        %s1996 = scalar_lea.vmem [#allocation11], %s1995
        // Predicated region
        $region69: #{tpu_custom_call.1} parent=43 // pred_check
          %p1997 = pneg %p221
        $region70: #{tpu_custom_call.1} parent=43 // pred_check_branch
          %1999 = sbr.rel (%p1997) target = $region72
        $region71: #{tpu_custom_call.1} parent=43 // pred_region
          %s2000 = smul.u32 16, %s29
          %s2002 = ssub.s32 2048, 2048
          %2003 = vsyncadd %s1993, %s2002
          %s2004 = smul.addr %s28, 32
          %s2005 = sadd.s32 %s2000, %s2004
          %s2006 = smul.addr %s2005, 128
          %s2007 = scalar_lea.hbm %s6, %s2006
          %s2008 = sshll.u32 %s1996, 4
          %s2009 = int_to_ptr.vmem [resolvable:$true] %s2008
          %2014 = dma.vmem_to_hbm [thread:$0]  %s2009, 2048, %s2007, %s1993, 128, 128, 8
        $region72: #{tpu_custom_call.1} parent=43 // pred_fallthru
          _
      $region44: #{tpu_custom_call.1} parent=5 // pred_fallthru
        _
      %p2015 = scmp.le.s32.totalorder 2, %s19
      // Predicated region
      $region73: #{tpu_custom_call.1} parent=5 // pred_check
        %p2016 = pneg %p2015
      $region74: #{tpu_custom_call.1} parent=5 // pred_check_branch
        %2018 = sbr.rel (%p2016) target = $region76
      $region75: #{tpu_custom_call.1} parent=5 // pred_region
        %s2019 = ssub.s32 %s19, 2
        // Predicated region
        $region77: #{tpu_custom_call.1} parent=75 // pred_check
          %p2020 = pneg %p227
        $region78: #{tpu_custom_call.1} parent=75 // pred_check_branch
          %2022 = sbr.rel (%p2020) target = $region80
        $region79: #{tpu_custom_call.1} parent=75 // pred_region
          %s2023 = sand.u32 %s212, 1
          %s2024 = scalar_lea.sflag [#allocation4], %s2023
          %s2025 = sand.u32 %s212, 1
          %s2026 = smul.addr %s2025, 128
          %s2027 = scalar_lea.vmem [#allocation11], %s2026
          %2028 = dma.done %s2024, 2048
        $region80: #{tpu_custom_call.1} parent=75 // pred_fallthru
          _
      $region76: #{tpu_custom_call.1} parent=5 // pred_fallthru
        _
    $region6: #{tpu_custom_call.1} parent=1 // loop_footer
      %s23 = sadd.s32 1, %s19
    $region7: #{tpu_custom_call.1} parent=1 // loop_footer_branch
      %18 = sbr.rel target = $region3
    $region8: #{tpu_custom_call.1} parent=1 // loop_exit
      _
    %2029 = vsyncpa [#allocation3], 1
    %s2030 = scalar_lea.sflag [#allocation3], 1
    %2031 = vsyncpa %s2030, 1
    %2032 = vsyncpa [#allocation6], 1
    %2033 = vsyncpa [#allocation4], 1
    %s2034 = scalar_lea.sflag [#allocation4], 1
    %2035 = vsyncpa %s2034, 1

</llo_original>
